<compile_context>
chip_gen: v6e
topology: v6e:2x2x1
jax: 0.10.0
libtpu: 0.0.40
codegen_flags: <defaults>
</compile_context>

<pallas_src>
import jax
import jax.numpy as jnp
from jax.experimental import pallas as pl
from jax.experimental.pallas import tpu as pltpu

NUM_SKEL_ITER = 10   # ToolSkeletonize(num_iter=10) inside soft_dice_cldice.__init__
ALPHA = 0.5
SMOOTH = 1.0


# ------------------------------------ kernel -----------------------------------------

def _make_kernel(Bt, H, L, W):
    """Kernel over one batch block.  Refs are 2-D: rows = Bt*H (batch folded into
    sublanes), cols = L = f*W (f images folded into lanes)."""
    R = Bt * H          # rows of one input block
    R2 = 2 * R          # y_true block stacked on top of y_pred block
    POS = float("inf")
    NEG = float("-inf")

    def kernel(yt_ref, yp_ref, out_ref):
        yt = yt_ref[...]
        yp = yp_ref[...]
        x = jnp.concatenate([yt, yp], axis=0)             # (R2, L)

        # Border masks, built once and reused by every pooling pass (hoisted).
        r_idx = jax.lax.broadcasted_iota(jnp.int32, (R2, L), 0) % H
        l_idx = jax.lax.broadcasted_iota(jnp.int32, (R2, L), 1) % W
        h_first = r_idx == 0
        h_last = r_idx == H - 1
        w_first = l_idx == 0
        w_last = l_idx == W - 1

        # window-3, stride-1, "same" pooling; borders (image boundaries inside the
        # folded plane included) contribute `fill`, matching torch max_pool2d's
        # implicit -inf padding (and +inf for the min-pool via -max_pool(-x)).
        def pool_h(a, fill, op):
            up = jnp.where(h_first, fill, pltpu.roll(a, 1, axis=0))       # value at r-1
            dn = jnp.where(h_last, fill, pltpu.roll(a, R2 - 1, axis=0))   # value at r+1
            return op(a, op(up, dn))

        def pool_w(a, fill, op):
            lt = jnp.where(w_first, fill, pltpu.roll(a, 1, axis=1))       # value at c-1
            rt = jnp.where(w_last, fill, pltpu.roll(a, L - 1, axis=1))    # value at c+1
            return op(a, op(lt, rt))

        def erode(a):      # min((3,1) min-pool, (1,3) min-pool)
            return jnp.minimum(pool_h(a, POS, jnp.minimum),
                               pool_w(a, POS, jnp.minimum))

        def dilate(a):     # separable 3x3 max-pool
            return pool_w(pool_h(a, NEG, jnp.maximum), NEG, jnp.maximum)

        relu = lambda a: jnp.maximum(a, 0.0)

        # Soft skeletonization with cached erosion:
        #   e = erode(img) is computed once per generation and becomes the next img.
        e = erode(x)
        skel = relu(x - dilate(e))
        for _ in range(NUM_SKEL_ITER):
            img = e
            e = erode(img)
            delta = relu(img - dilate(e))
            skel = skel + relu(delta - skel * delta)

        skel_t = skel[:R, :]
        skel_p = skel[R:, :]

        def lane_sum(a):   # (R, L) -> (1, L) per-lane partial sums (VPU-only reduce)
            return jnp.sum(a, axis=0, keepdims=True)

        out_ref[...] = jnp.concatenate(
            [
                lane_sum(yt * yp),        # intersection
                lane_sum(yt),             # sum(y_true)
                lane_sum(yp),             # sum(y_pred)
                lane_sum(skel_p * yt),    # tprec numerator
                lane_sum(skel_p),         # tprec denominator
                lane_sum(skel_t * yp),    # tsens numerator
                lane_sum(skel_t),         # tsens denominator
                jnp.zeros((1, L), jnp.float32),
            ],
            axis=0,
        )

    return kernel


# ------------------------------------ wrapper -----------------------------------------

def soft_dice_cldice(y_true, y_pred):
    """y_true, y_pred: (N, C, H, W) float arrays.  Returns scalar float32 loss."""
    N, C, H, W = y_true.shape
    B = N * C
    yt = y_true.astype(jnp.float32).reshape(B, H, W)
    yp = y_pred.astype(jnp.float32).reshape(B, H, W)

    # Fold f images side-by-side into the lane dimension (lane-dense last dim).
    fmax = max(1, 128 // W)
    f = 1
    for d in range(1, min(B, fmax) + 1):
        if B % d == 0:
            f = d
    Bf = B // f
    L = f * W

    def fold(a):  # (B, H, W) -> (Bf*H, L); row = g*H + h, col = j*W + w
        return a.reshape(Bf, f, H, W).transpose(0, 2, 1, 3).reshape(Bf * H, L)

    yt_f = fold(yt)
    yp_f = fold(yp)

    # Batch tile: largest divisor of Bf whose f32 input block stays <= ~512 KiB and
    # keeps the block sublane-aligned (leaves VMEM headroom for the ~6 live temporaries
    # at 2x block size, and for double-buffered pipelining; re-derives per shape so the
    # same code is safe under v7x's smaller VMEM).
    budget = 512 * 1024
    divisors = [d for d in range(1, Bf + 1) if Bf % d == 0]
    ok = [d for d in divisors
          if (d == Bf or (d * H) % 8 == 0) and d * H * L * 4 <= budget]
    if ok:
        Bt = max(ok)
    else:
        Bt = min(d for d in divisors if d == Bf or (d * H) % 8 == 0)
    num_blocks = Bf // Bt
    R = Bt * H

    kernel = _make_kernel(Bt, H, L, W)

    elems = 2 * B * H * W
    cost = pl.CostEstimate(
        flops=int(elems * (NUM_SKEL_ITER + 1) * 20),
        transcendentals=0,
        bytes_accessed=int(2 * B * H * W * 4 + num_blocks * 8 * L * 4),
    )

    partial = pl.pallas_call(
        kernel,
        out_shape=jax.ShapeDtypeStruct((num_blocks * 8, L), jnp.float32),
        grid_spec=pltpu.PrefetchScalarGridSpec(
            num_scalar_prefetch=0,
            grid=(num_blocks,),
            in_specs=[
                pl.BlockSpec((R, L), lambda i: (i, 0)),
                pl.BlockSpec((R, L), lambda i: (i, 0)),
            ],
            out_specs=pl.BlockSpec((8, L), lambda i: (i, 0)),
        ),
        compiler_params=pltpu.CompilerParams(
            dimension_semantics=("parallel",),
            vmem_limit_bytes=32 * 1024 * 1024,
        ),
        cost_estimate=cost,
    )(yt_f, yp_f)

    # Tiny scalar epilogue in plain JAX (sum partial lane-sums over blocks and lanes).
    sums = partial.reshape(num_blocks, 8, L).sum(axis=(0, 2))
    inter, s_yt, s_yp, sp_yt, sp, st_yp, st = (sums[k] for k in range(7))

    dice = 1.0 - (2.0 * inter + SMOOTH) / (s_yt + s_yp + SMOOTH)
    tprec = (sp_yt + SMOOTH) / (sp + SMOOTH)
    tsens = (st_yp + SMOOTH) / (st + SMOOTH)
    cl_dice = 1.0 - 2.0 * (tprec * tsens) / (tprec + tsens)
    return (1.0 - ALPHA) * dice + ALPHA * cl_dice


# ------------------------- independent pure-JAX reference ----------------------------
# Mirrors the PyTorch module directly: true 3x3 / (3,1) / (1,3) reduce_window pooling
# with +/-inf padding and the original (uncached) soft_skel loop.

def _reference(y_true, y_pred):
    N, C, H, W = y_true.shape
    yt = y_true.astype(jnp.float32).reshape(N * C, H, W)
    yp = y_pred.astype(jnp.float32).reshape(N * C, H, W)

    def minpool(x, wh, ww):
        return jax.lax.reduce_window(x, jnp.float32(jnp.inf), jax.lax.min,
                                     (1, wh, ww), (1, 1, 1), "SAME")

    def maxpool(x, wh, ww):
        return jax.lax.reduce_window(x, jnp.float32(-jnp.inf), jax.lax.max,
                                     (1, wh, ww), (1, 1, 1), "SAME")

    def erode(x):
        return jnp.minimum(minpool(x, 3, 1), minpool(x, 1, 3))

    def dilate(x):
        return maxpool(x, 3, 3)

    def soft_open(x):
        return dilate(erode(x))

    def soft_skel(img):
        img1 = soft_open(img)
        skel = jax.nn.relu(img - img1)
        for _ in range(NUM_SKEL_ITER):
            img = erode(img)
            img1 = soft_open(img)
            delta = jax.nn.relu(img - img1)
            skel = skel + jax.nn.relu(delta - skel * delta)
        return skel

    inter = jnp.sum(yt * yp)
    dice = 1.0 - (2.0 * inter + SMOOTH) / (jnp.sum(yt) + jnp.sum(yp) + SMOOTH)
    skel_p = soft_skel(yp)
    skel_t = soft_skel(yt)
    tprec = (jnp.sum(skel_p * yt) + SMOOTH) / (jnp.sum(skel_p) + SMOOTH)
    tsens = (jnp.sum(skel_t * yp) + SMOOTH) / (jnp.sum(skel_t) + SMOOTH)
    cl_dice = 1.0 - 2.0 * (tprec * tsens) / (tprec + tsens)
    return (1.0 - ALPHA) * dice + ALPHA * cl_dice


if __name__ == "__main__":
    key = jax.random.PRNGKey(0)
    k1, k2 = jax.random.split(key)
    # NCHW, like the PyTorch module expects.
    y_true = (jax.random.uniform(k1, (2, 4, 16, 16), jnp.float32) > 0.5).astype(jnp.float32)
    y_pred = jax.random.uniform(k2, (2, 4, 16, 16), jnp.float32)

    loss = jax.block_until_ready(soft_dice_cldice(y_true, y_pred))
    ref = jax.block_until_ready(_reference(y_true, y_pred))

    assert jnp.isfinite(loss), "kernel produced non-finite loss"
    assert abs(float(loss) - float(ref)) < 1e-4, (float(loss), float(ref))
    print("KERNEL_OK")
</pallas_src>

<mosaic_0001>
module attributes {stable_mosaic.version = 11 : i64} {
  func.func @kernel(%arg0: i32, %arg1: memref<16x128xf32, #tpu.memory_space<vmem>>, %arg2: memref<16x128xf32, #tpu.memory_space<vmem>>, %arg3: memref<8x128xf32, #tpu.memory_space<vmem>>) attributes {dimension_semantics = [#tpu.dimension_semantics<parallel>], iteration_bounds = array<i64: 1>, scalar_prefetch = 0 : i64, scratch_operands = 0 : i64, tpu.core_type = #tpu.core_type<tc>, window_params = [{transform_indices = @transform_0, window_bounds = array<i64: 16, 128>}, {transform_indices = @transform_1, window_bounds = array<i64: 16, 128>}, {transform_indices = @transform_2, window_bounds = array<i64: 8, 128>}]} {
    %c0 = arith.constant 0 : index
    %c0_0 = arith.constant 0 : index
    %0 = vector.load %arg1[%c0, %c0_0] : memref<16x128xf32, #tpu.memory_space<vmem>>, vector<16x128xf32>
    %c0_1 = arith.constant 0 : index
    %c0_2 = arith.constant 0 : index
    %1 = vector.load %arg2[%c0_1, %c0_2] : memref<16x128xf32, #tpu.memory_space<vmem>>, vector<16x128xf32>
    %2 = tpu.concatenate %0, %1 in 0 : vector<16x128xf32>, vector<16x128xf32> -> vector<32x128xf32>
    %3 = tpu.iota {dimensions = array<i32: 0>} : vector<32x128xi32>
    %c16_i32 = arith.constant 16 : i32
    %c0_i32 = arith.constant 0 : i32
    %4 = arith.cmpi eq, %c16_i32, %c0_i32 : i32
    %c1_i32 = arith.constant 1 : i32
    %5 = arith.select %4, %c1_i32, %c16_i32 : i32
    %6 = vector.broadcast %5 : i32 to vector<32x128xi32>
    %7 = arith.remsi %3, %6 : vector<32x128xi32>
    %c0_i32_3 = arith.constant 0 : i32
    %8 = vector.broadcast %c0_i32_3 : i32 to vector<32x128xi32>
    %9 = arith.cmpi ne, %7, %8 : vector<32x128xi32>
    %c0_i32_4 = arith.constant 0 : i32
    %10 = vector.broadcast %c0_i32_4 : i32 to vector<32x128xi32>
    %11 = arith.cmpi slt, %7, %10 : vector<32x128xi32>
    %c0_i32_5 = arith.constant 0 : i32
    %12 = arith.cmpi slt, %5, %c0_i32_5 : i32
    %13 = vector.broadcast %12 : i1 to vector<32x128xi1>
    %14 = vector.broadcast %13 : vector<32x128xi1> to vector<32x128xi1>
    %15 = arith.xori %11, %14 : vector<32x128xi1>
    %16 = arith.andi %15, %9 : vector<32x128xi1>
    %17 = vector.broadcast %5 : i32 to vector<32x128xi32>
    %18 = arith.addi %7, %17 : vector<32x128xi32>
    %19 = arith.select %16, %18, %7 : vector<32x128xi1>, vector<32x128xi32>
    %20 = tpu.iota {dimensions = array<i32: 1>} : vector<32x128xi32>
    %c16_i32_6 = arith.constant 16 : i32
    %c0_i32_7 = arith.constant 0 : i32
    %21 = arith.cmpi eq, %c16_i32_6, %c0_i32_7 : i32
    %c1_i32_8 = arith.constant 1 : i32
    %22 = arith.select %21, %c1_i32_8, %c16_i32_6 : i32
    %23 = vector.broadcast %22 : i32 to vector<32x128xi32>
    %24 = arith.remsi %20, %23 : vector<32x128xi32>
    %c0_i32_9 = arith.constant 0 : i32
    %25 = vector.broadcast %c0_i32_9 : i32 to vector<32x128xi32>
    %26 = arith.cmpi ne, %24, %25 : vector<32x128xi32>
    %c0_i32_10 = arith.constant 0 : i32
    %27 = vector.broadcast %c0_i32_10 : i32 to vector<32x128xi32>
    %28 = arith.cmpi slt, %24, %27 : vector<32x128xi32>
    %c0_i32_11 = arith.constant 0 : i32
    %29 = arith.cmpi slt, %22, %c0_i32_11 : i32
    %30 = vector.broadcast %29 : i1 to vector<32x128xi1>
    %31 = vector.broadcast %30 : vector<32x128xi1> to vector<32x128xi1>
    %32 = arith.xori %28, %31 : vector<32x128xi1>
    %33 = arith.andi %32, %26 : vector<32x128xi1>
    %34 = vector.broadcast %22 : i32 to vector<32x128xi32>
    %35 = arith.addi %24, %34 : vector<32x128xi32>
    %36 = arith.select %33, %35, %24 : vector<32x128xi1>, vector<32x128xi32>
    %c0_i32_12 = arith.constant 0 : i32
    %37 = vector.broadcast %c0_i32_12 : i32 to vector<32x128xi32>
    %38 = arith.cmpi eq, %19, %37 : vector<32x128xi32>
    %c15_i32 = arith.constant 15 : i32
    %39 = vector.broadcast %c15_i32 : i32 to vector<32x128xi32>
    %40 = arith.cmpi eq, %19, %39 : vector<32x128xi32>
    %c0_i32_13 = arith.constant 0 : i32
    %41 = vector.broadcast %c0_i32_13 : i32 to vector<32x128xi32>
    %42 = arith.cmpi eq, %36, %41 : vector<32x128xi32>
    %c15_i32_14 = arith.constant 15 : i32
    %43 = vector.broadcast %c15_i32_14 : i32 to vector<32x128xi32>
    %44 = arith.cmpi eq, %36, %43 : vector<32x128xi32>
    %c1_i32_15 = arith.constant 1 : i32
    %45 = tpu.dynamic_rotate %2 by %c1_i32_15 dim 0 : vector<32x128xf32>, i32 -> vector<32x128xf32>
    %cst = arith.constant 0x7F800000 : f32
    %46 = vector.broadcast %cst : f32 to vector<32x128xf32>
    %47 = arith.select %38, %46, %45 : vector<32x128xi1>, vector<32x128xf32>
    %c31_i32 = arith.constant 31 : i32
    %48 = tpu.dynamic_rotate %2 by %c31_i32 dim 0 : vector<32x128xf32>, i32 -> vector<32x128xf32>
    %cst_16 = arith.constant 0x7F800000 : f32
    %49 = vector.broadcast %cst_16 : f32 to vector<32x128xf32>
    %50 = arith.select %40, %49, %48 : vector<32x128xi1>, vector<32x128xf32>
    %51 = arith.minimumf %47, %50 : vector<32x128xf32>
    %52 = arith.minimumf %2, %51 : vector<32x128xf32>
    %c1_i32_17 = arith.constant 1 : i32
    %53 = tpu.dynamic_rotate %2 by %c1_i32_17 dim 1 : vector<32x128xf32>, i32 -> vector<32x128xf32>
    %cst_18 = arith.constant 0x7F800000 : f32
    %54 = vector.broadcast %cst_18 : f32 to vector<32x128xf32>
    %55 = arith.select %42, %54, %53 : vector<32x128xi1>, vector<32x128xf32>
    %c127_i32 = arith.constant 127 : i32
    %56 = tpu.dynamic_rotate %2 by %c127_i32 dim 1 : vector<32x128xf32>, i32 -> vector<32x128xf32>
    %cst_19 = arith.constant 0x7F800000 : f32
    %57 = vector.broadcast %cst_19 : f32 to vector<32x128xf32>
    %58 = arith.select %44, %57, %56 : vector<32x128xi1>, vector<32x128xf32>
    %59 = arith.minimumf %55, %58 : vector<32x128xf32>
    %60 = arith.minimumf %2, %59 : vector<32x128xf32>
    %61 = arith.minimumf %52, %60 : vector<32x128xf32>
    %c1_i32_20 = arith.constant 1 : i32
    %62 = tpu.dynamic_rotate %61 by %c1_i32_20 dim 0 : vector<32x128xf32>, i32 -> vector<32x128xf32>
    %cst_21 = arith.constant 0xFF800000 : f32
    %63 = vector.broadcast %cst_21 : f32 to vector<32x128xf32>
    %64 = arith.select %38, %63, %62 : vector<32x128xi1>, vector<32x128xf32>
    %c31_i32_22 = arith.constant 31 : i32
    %65 = tpu.dynamic_rotate %61 by %c31_i32_22 dim 0 : vector<32x128xf32>, i32 -> vector<32x128xf32>
    %cst_23 = arith.constant 0xFF800000 : f32
    %66 = vector.broadcast %cst_23 : f32 to vector<32x128xf32>
    %67 = arith.select %40, %66, %65 : vector<32x128xi1>, vector<32x128xf32>
    %68 = arith.maximumf %64, %67 : vector<32x128xf32>
    %69 = arith.maximumf %61, %68 : vector<32x128xf32>
    %c1_i32_24 = arith.constant 1 : i32
    %70 = tpu.dynamic_rotate %69 by %c1_i32_24 dim 1 : vector<32x128xf32>, i32 -> vector<32x128xf32>
    %cst_25 = arith.constant 0xFF800000 : f32
    %71 = vector.broadcast %cst_25 : f32 to vector<32x128xf32>
    %72 = arith.select %42, %71, %70 : vector<32x128xi1>, vector<32x128xf32>
    %c127_i32_26 = arith.constant 127 : i32
    %73 = tpu.dynamic_rotate %69 by %c127_i32_26 dim 1 : vector<32x128xf32>, i32 -> vector<32x128xf32>
    %cst_27 = arith.constant 0xFF800000 : f32
    %74 = vector.broadcast %cst_27 : f32 to vector<32x128xf32>
    %75 = arith.select %44, %74, %73 : vector<32x128xi1>, vector<32x128xf32>
    %76 = arith.maximumf %72, %75 : vector<32x128xf32>
    %77 = arith.maximumf %69, %76 : vector<32x128xf32>
    %78 = arith.subf %2, %77 : vector<32x128xf32>
    %cst_28 = arith.constant 0.000000e+00 : f32
    %79 = vector.broadcast %cst_28 : f32 to vector<32x128xf32>
    %80 = arith.maximumf %78, %79 : vector<32x128xf32>
    %c1_i32_29 = arith.constant 1 : i32
    %81 = tpu.dynamic_rotate %61 by %c1_i32_29 dim 0 : vector<32x128xf32>, i32 -> vector<32x128xf32>
    %cst_30 = arith.constant 0x7F800000 : f32
    %82 = vector.broadcast %cst_30 : f32 to vector<32x128xf32>
    %83 = arith.select %38, %82, %81 : vector<32x128xi1>, vector<32x128xf32>
    %c31_i32_31 = arith.constant 31 : i32
    %84 = tpu.dynamic_rotate %61 by %c31_i32_31 dim 0 : vector<32x128xf32>, i32 -> vector<32x128xf32>
    %cst_32 = arith.constant 0x7F800000 : f32
    %85 = vector.broadcast %cst_32 : f32 to vector<32x128xf32>
    %86 = arith.select %40, %85, %84 : vector<32x128xi1>, vector<32x128xf32>
    %87 = arith.minimumf %83, %86 : vector<32x128xf32>
    %88 = arith.minimumf %61, %87 : vector<32x128xf32>
    %c1_i32_33 = arith.constant 1 : i32
    %89 = tpu.dynamic_rotate %61 by %c1_i32_33 dim 1 : vector<32x128xf32>, i32 -> vector<32x128xf32>
    %cst_34 = arith.constant 0x7F800000 : f32
    %90 = vector.broadcast %cst_34 : f32 to vector<32x128xf32>
    %91 = arith.select %42, %90, %89 : vector<32x128xi1>, vector<32x128xf32>
    %c127_i32_35 = arith.constant 127 : i32
    %92 = tpu.dynamic_rotate %61 by %c127_i32_35 dim 1 : vector<32x128xf32>, i32 -> vector<32x128xf32>
    %cst_36 = arith.constant 0x7F800000 : f32
    %93 = vector.broadcast %cst_36 : f32 to vector<32x128xf32>
    %94 = arith.select %44, %93, %92 : vector<32x128xi1>, vector<32x128xf32>
    %95 = arith.minimumf %91, %94 : vector<32x128xf32>
    %96 = arith.minimumf %61, %95 : vector<32x128xf32>
    %97 = arith.minimumf %88, %96 : vector<32x128xf32>
    %c1_i32_37 = arith.constant 1 : i32
    %98 = tpu.dynamic_rotate %97 by %c1_i32_37 dim 0 : vector<32x128xf32>, i32 -> vector<32x128xf32>
    %cst_38 = arith.constant 0xFF800000 : f32
    %99 = vector.broadcast %cst_38 : f32 to vector<32x128xf32>
    %100 = arith.select %38, %99, %98 : vector<32x128xi1>, vector<32x128xf32>
    %c31_i32_39 = arith.constant 31 : i32
    %101 = tpu.dynamic_rotate %97 by %c31_i32_39 dim 0 : vector<32x128xf32>, i32 -> vector<32x128xf32>
    %cst_40 = arith.constant 0xFF800000 : f32
    %102 = vector.broadcast %cst_40 : f32 to vector<32x128xf32>
    %103 = arith.select %40, %102, %101 : vector<32x128xi1>, vector<32x128xf32>
    %104 = arith.maximumf %100, %103 : vector<32x128xf32>
    %105 = arith.maximumf %97, %104 : vector<32x128xf32>
    %c1_i32_41 = arith.constant 1 : i32
    %106 = tpu.dynamic_rotate %105 by %c1_i32_41 dim 1 : vector<32x128xf32>, i32 -> vector<32x128xf32>
    %cst_42 = arith.constant 0xFF800000 : f32
    %107 = vector.broadcast %cst_42 : f32 to vector<32x128xf32>
    %108 = arith.select %42, %107, %106 : vector<32x128xi1>, vector<32x128xf32>
    %c127_i32_43 = arith.constant 127 : i32
    %109 = tpu.dynamic_rotate %105 by %c127_i32_43 dim 1 : vector<32x128xf32>, i32 -> vector<32x128xf32>
    %cst_44 = arith.constant 0xFF800000 : f32
    %110 = vector.broadcast %cst_44 : f32 to vector<32x128xf32>
    %111 = arith.select %44, %110, %109 : vector<32x128xi1>, vector<32x128xf32>
    %112 = arith.maximumf %108, %111 : vector<32x128xf32>
    %113 = arith.maximumf %105, %112 : vector<32x128xf32>
    %114 = arith.subf %61, %113 : vector<32x128xf32>
    %cst_45 = arith.constant 0.000000e+00 : f32
    %115 = vector.broadcast %cst_45 : f32 to vector<32x128xf32>
    %116 = arith.maximumf %114, %115 : vector<32x128xf32>
    %117 = arith.mulf %80, %116 : vector<32x128xf32>
    %118 = arith.subf %116, %117 : vector<32x128xf32>
    %cst_46 = arith.constant 0.000000e+00 : f32
    %119 = vector.broadcast %cst_46 : f32 to vector<32x128xf32>
    %120 = arith.maximumf %118, %119 : vector<32x128xf32>
    %121 = arith.addf %80, %120 : vector<32x128xf32>
    %c1_i32_47 = arith.constant 1 : i32
    %122 = tpu.dynamic_rotate %97 by %c1_i32_47 dim 0 : vector<32x128xf32>, i32 -> vector<32x128xf32>
    %cst_48 = arith.constant 0x7F800000 : f32
    %123 = vector.broadcast %cst_48 : f32 to vector<32x128xf32>
    %124 = arith.select %38, %123, %122 : vector<32x128xi1>, vector<32x128xf32>
    %c31_i32_49 = arith.constant 31 : i32
    %125 = tpu.dynamic_rotate %97 by %c31_i32_49 dim 0 : vector<32x128xf32>, i32 -> vector<32x128xf32>
    %cst_50 = arith.constant 0x7F800000 : f32
    %126 = vector.broadcast %cst_50 : f32 to vector<32x128xf32>
    %127 = arith.select %40, %126, %125 : vector<32x128xi1>, vector<32x128xf32>
    %128 = arith.minimumf %124, %127 : vector<32x128xf32>
    %129 = arith.minimumf %97, %128 : vector<32x128xf32>
    %c1_i32_51 = arith.constant 1 : i32
    %130 = tpu.dynamic_rotate %97 by %c1_i32_51 dim 1 : vector<32x128xf32>, i32 -> vector<32x128xf32>
    %cst_52 = arith.constant 0x7F800000 : f32
    %131 = vector.broadcast %cst_52 : f32 to vector<32x128xf32>
    %132 = arith.select %42, %131, %130 : vector<32x128xi1>, vector<32x128xf32>
    %c127_i32_53 = arith.constant 127 : i32
    %133 = tpu.dynamic_rotate %97 by %c127_i32_53 dim 1 : vector<32x128xf32>, i32 -> vector<32x128xf32>
    %cst_54 = arith.constant 0x7F800000 : f32
    %134 = vector.broadcast %cst_54 : f32 to vector<32x128xf32>
    %135 = arith.select %44, %134, %133 : vector<32x128xi1>, vector<32x128xf32>
    %136 = arith.minimumf %132, %135 : vector<32x128xf32>
    %137 = arith.minimumf %97, %136 : vector<32x128xf32>
    %138 = arith.minimumf %129, %137 : vector<32x128xf32>
    %c1_i32_55 = arith.constant 1 : i32
    %139 = tpu.dynamic_rotate %138 by %c1_i32_55 dim 0 : vector<32x128xf32>, i32 -> vector<32x128xf32>
    %cst_56 = arith.constant 0xFF800000 : f32
    %140 = vector.broadcast %cst_56 : f32 to vector<32x128xf32>
    %141 = arith.select %38, %140, %139 : vector<32x128xi1>, vector<32x128xf32>
    %c31_i32_57 = arith.constant 31 : i32
    %142 = tpu.dynamic_rotate %138 by %c31_i32_57 dim 0 : vector<32x128xf32>, i32 -> vector<32x128xf32>
    %cst_58 = arith.constant 0xFF800000 : f32
    %143 = vector.broadcast %cst_58 : f32 to vector<32x128xf32>
    %144 = arith.select %40, %143, %142 : vector<32x128xi1>, vector<32x128xf32>
    %145 = arith.maximumf %141, %144 : vector<32x128xf32>
    %146 = arith.maximumf %138, %145 : vector<32x128xf32>
    %c1_i32_59 = arith.constant 1 : i32
    %147 = tpu.dynamic_rotate %146 by %c1_i32_59 dim 1 : vector<32x128xf32>, i32 -> vector<32x128xf32>
    %cst_60 = arith.constant 0xFF800000 : f32
    %148 = vector.broadcast %cst_60 : f32 to vector<32x128xf32>
    %149 = arith.select %42, %148, %147 : vector<32x128xi1>, vector<32x128xf32>
    %c127_i32_61 = arith.constant 127 : i32
    %150 = tpu.dynamic_rotate %146 by %c127_i32_61 dim 1 : vector<32x128xf32>, i32 -> vector<32x128xf32>
    %cst_62 = arith.constant 0xFF800000 : f32
    %151 = vector.broadcast %cst_62 : f32 to vector<32x128xf32>
    %152 = arith.select %44, %151, %150 : vector<32x128xi1>, vector<32x128xf32>
    %153 = arith.maximumf %149, %152 : vector<32x128xf32>
    %154 = arith.maximumf %146, %153 : vector<32x128xf32>
    %155 = arith.subf %97, %154 : vector<32x128xf32>
    %cst_63 = arith.constant 0.000000e+00 : f32
    %156 = vector.broadcast %cst_63 : f32 to vector<32x128xf32>
    %157 = arith.maximumf %155, %156 : vector<32x128xf32>
    %158 = arith.mulf %121, %157 : vector<32x128xf32>
    %159 = arith.subf %157, %158 : vector<32x128xf32>
    %cst_64 = arith.constant 0.000000e+00 : f32
    %160 = vector.broadcast %cst_64 : f32 to vector<32x128xf32>
    %161 = arith.maximumf %159, %160 : vector<32x128xf32>
    %162 = arith.addf %121, %161 : vector<32x128xf32>
    %c1_i32_65 = arith.constant 1 : i32
    %163 = tpu.dynamic_rotate %138 by %c1_i32_65 dim 0 : vector<32x128xf32>, i32 -> vector<32x128xf32>
    %cst_66 = arith.constant 0x7F800000 : f32
    %164 = vector.broadcast %cst_66 : f32 to vector<32x128xf32>
    %165 = arith.select %38, %164, %163 : vector<32x128xi1>, vector<32x128xf32>
    %c31_i32_67 = arith.constant 31 : i32
    %166 = tpu.dynamic_rotate %138 by %c31_i32_67 dim 0 : vector<32x128xf32>, i32 -> vector<32x128xf32>
    %cst_68 = arith.constant 0x7F800000 : f32
    %167 = vector.broadcast %cst_68 : f32 to vector<32x128xf32>
    %168 = arith.select %40, %167, %166 : vector<32x128xi1>, vector<32x128xf32>
    %169 = arith.minimumf %165, %168 : vector<32x128xf32>
    %170 = arith.minimumf %138, %169 : vector<32x128xf32>
    %c1_i32_69 = arith.constant 1 : i32
    %171 = tpu.dynamic_rotate %138 by %c1_i32_69 dim 1 : vector<32x128xf32>, i32 -> vector<32x128xf32>
    %cst_70 = arith.constant 0x7F800000 : f32
    %172 = vector.broadcast %cst_70 : f32 to vector<32x128xf32>
    %173 = arith.select %42, %172, %171 : vector<32x128xi1>, vector<32x128xf32>
    %c127_i32_71 = arith.constant 127 : i32
    %174 = tpu.dynamic_rotate %138 by %c127_i32_71 dim 1 : vector<32x128xf32>, i32 -> vector<32x128xf32>
    %cst_72 = arith.constant 0x7F800000 : f32
    %175 = vector.broadcast %cst_72 : f32 to vector<32x128xf32>
    %176 = arith.select %44, %175, %174 : vector<32x128xi1>, vector<32x128xf32>
    %177 = arith.minimumf %173, %176 : vector<32x128xf32>
    %178 = arith.minimumf %138, %177 : vector<32x128xf32>
    %179 = arith.minimumf %170, %178 : vector<32x128xf32>
    %c1_i32_73 = arith.constant 1 : i32
    %180 = tpu.dynamic_rotate %179 by %c1_i32_73 dim 0 : vector<32x128xf32>, i32 -> vector<32x128xf32>
    %cst_74 = arith.constant 0xFF800000 : f32
    %181 = vector.broadcast %cst_74 : f32 to vector<32x128xf32>
    %182 = arith.select %38, %181, %180 : vector<32x128xi1>, vector<32x128xf32>
    %c31_i32_75 = arith.constant 31 : i32
    %183 = tpu.dynamic_rotate %179 by %c31_i32_75 dim 0 : vector<32x128xf32>, i32 -> vector<32x128xf32>
    %cst_76 = arith.constant 0xFF800000 : f32
    %184 = vector.broadcast %cst_76 : f32 to vector<32x128xf32>
    %185 = arith.select %40, %184, %183 : vector<32x128xi1>, vector<32x128xf32>
    %186 = arith.maximumf %182, %185 : vector<32x128xf32>
    %187 = arith.maximumf %179, %186 : vector<32x128xf32>
    %c1_i32_77 = arith.constant 1 : i32
    %188 = tpu.dynamic_rotate %187 by %c1_i32_77 dim 1 : vector<32x128xf32>, i32 -> vector<32x128xf32>
    %cst_78 = arith.constant 0xFF800000 : f32
    %189 = vector.broadcast %cst_78 : f32 to vector<32x128xf32>
    %190 = arith.select %42, %189, %188 : vector<32x128xi1>, vector<32x128xf32>
    %c127_i32_79 = arith.constant 127 : i32
    %191 = tpu.dynamic_rotate %187 by %c127_i32_79 dim 1 : vector<32x128xf32>, i32 -> vector<32x128xf32>
    %cst_80 = arith.constant 0xFF800000 : f32
    %192 = vector.broadcast %cst_80 : f32 to vector<32x128xf32>
    %193 = arith.select %44, %192, %191 : vector<32x128xi1>, vector<32x128xf32>
    %194 = arith.maximumf %190, %193 : vector<32x128xf32>
    %195 = arith.maximumf %187, %194 : vector<32x128xf32>
    %196 = arith.subf %138, %195 : vector<32x128xf32>
    %cst_81 = arith.constant 0.000000e+00 : f32
    %197 = vector.broadcast %cst_81 : f32 to vector<32x128xf32>
    %198 = arith.maximumf %196, %197 : vector<32x128xf32>
    %199 = arith.mulf %162, %198 : vector<32x128xf32>
    %200 = arith.subf %198, %199 : vector<32x128xf32>
    %cst_82 = arith.constant 0.000000e+00 : f32
    %201 = vector.broadcast %cst_82 : f32 to vector<32x128xf32>
    %202 = arith.maximumf %200, %201 : vector<32x128xf32>
    %203 = arith.addf %162, %202 : vector<32x128xf32>
    %c1_i32_83 = arith.constant 1 : i32
    %204 = tpu.dynamic_rotate %179 by %c1_i32_83 dim 0 : vector<32x128xf32>, i32 -> vector<32x128xf32>
    %cst_84 = arith.constant 0x7F800000 : f32
    %205 = vector.broadcast %cst_84 : f32 to vector<32x128xf32>
    %206 = arith.select %38, %205, %204 : vector<32x128xi1>, vector<32x128xf32>
    %c31_i32_85 = arith.constant 31 : i32
    %207 = tpu.dynamic_rotate %179 by %c31_i32_85 dim 0 : vector<32x128xf32>, i32 -> vector<32x128xf32>
    %cst_86 = arith.constant 0x7F800000 : f32
    %208 = vector.broadcast %cst_86 : f32 to vector<32x128xf32>
    %209 = arith.select %40, %208, %207 : vector<32x128xi1>, vector<32x128xf32>
    %210 = arith.minimumf %206, %209 : vector<32x128xf32>
    %211 = arith.minimumf %179, %210 : vector<32x128xf32>
    %c1_i32_87 = arith.constant 1 : i32
    %212 = tpu.dynamic_rotate %179 by %c1_i32_87 dim 1 : vector<32x128xf32>, i32 -> vector<32x128xf32>
    %cst_88 = arith.constant 0x7F800000 : f32
    %213 = vector.broadcast %cst_88 : f32 to vector<32x128xf32>
    %214 = arith.select %42, %213, %212 : vector<32x128xi1>, vector<32x128xf32>
    %c127_i32_89 = arith.constant 127 : i32
    %215 = tpu.dynamic_rotate %179 by %c127_i32_89 dim 1 : vector<32x128xf32>, i32 -> vector<32x128xf32>
    %cst_90 = arith.constant 0x7F800000 : f32
    %216 = vector.broadcast %cst_90 : f32 to vector<32x128xf32>
    %217 = arith.select %44, %216, %215 : vector<32x128xi1>, vector<32x128xf32>
    %218 = arith.minimumf %214, %217 : vector<32x128xf32>
    %219 = arith.minimumf %179, %218 : vector<32x128xf32>
    %220 = arith.minimumf %211, %219 : vector<32x128xf32>
    %c1_i32_91 = arith.constant 1 : i32
    %221 = tpu.dynamic_rotate %220 by %c1_i32_91 dim 0 : vector<32x128xf32>, i32 -> vector<32x128xf32>
    %cst_92 = arith.constant 0xFF800000 : f32
    %222 = vector.broadcast %cst_92 : f32 to vector<32x128xf32>
    %223 = arith.select %38, %222, %221 : vector<32x128xi1>, vector<32x128xf32>
    %c31_i32_93 = arith.constant 31 : i32
    %224 = tpu.dynamic_rotate %220 by %c31_i32_93 dim 0 : vector<32x128xf32>, i32 -> vector<32x128xf32>
    %cst_94 = arith.constant 0xFF800000 : f32
    %225 = vector.broadcast %cst_94 : f32 to vector<32x128xf32>
    %226 = arith.select %40, %225, %224 : vector<32x128xi1>, vector<32x128xf32>
    %227 = arith.maximumf %223, %226 : vector<32x128xf32>
    %228 = arith.maximumf %220, %227 : vector<32x128xf32>
    %c1_i32_95 = arith.constant 1 : i32
    %229 = tpu.dynamic_rotate %228 by %c1_i32_95 dim 1 : vector<32x128xf32>, i32 -> vector<32x128xf32>
    %cst_96 = arith.constant 0xFF800000 : f32
    %230 = vector.broadcast %cst_96 : f32 to vector<32x128xf32>
    %231 = arith.select %42, %230, %229 : vector<32x128xi1>, vector<32x128xf32>
    %c127_i32_97 = arith.constant 127 : i32
    %232 = tpu.dynamic_rotate %228 by %c127_i32_97 dim 1 : vector<32x128xf32>, i32 -> vector<32x128xf32>
    %cst_98 = arith.constant 0xFF800000 : f32
    %233 = vector.broadcast %cst_98 : f32 to vector<32x128xf32>
    %234 = arith.select %44, %233, %232 : vector<32x128xi1>, vector<32x128xf32>
    %235 = arith.maximumf %231, %234 : vector<32x128xf32>
    %236 = arith.maximumf %228, %235 : vector<32x128xf32>
    %237 = arith.subf %179, %236 : vector<32x128xf32>
    %cst_99 = arith.constant 0.000000e+00 : f32
    %238 = vector.broadcast %cst_99 : f32 to vector<32x128xf32>
    %239 = arith.maximumf %237, %238 : vector<32x128xf32>
    %240 = arith.mulf %203, %239 : vector<32x128xf32>
    %241 = arith.subf %239, %240 : vector<32x128xf32>
    %cst_100 = arith.constant 0.000000e+00 : f32
    %242 = vector.broadcast %cst_100 : f32 to vector<32x128xf32>
    %243 = arith.maximumf %241, %242 : vector<32x128xf32>
    %244 = arith.addf %203, %243 : vector<32x128xf32>
    %c1_i32_101 = arith.constant 1 : i32
    %245 = tpu.dynamic_rotate %220 by %c1_i32_101 dim 0 : vector<32x128xf32>, i32 -> vector<32x128xf32>
    %cst_102 = arith.constant 0x7F800000 : f32
    %246 = vector.broadcast %cst_102 : f32 to vector<32x128xf32>
    %247 = arith.select %38, %246, %245 : vector<32x128xi1>, vector<32x128xf32>
    %c31_i32_103 = arith.constant 31 : i32
    %248 = tpu.dynamic_rotate %220 by %c31_i32_103 dim 0 : vector<32x128xf32>, i32 -> vector<32x128xf32>
    %cst_104 = arith.constant 0x7F800000 : f32
    %249 = vector.broadcast %cst_104 : f32 to vector<32x128xf32>
    %250 = arith.select %40, %249, %248 : vector<32x128xi1>, vector<32x128xf32>
    %251 = arith.minimumf %247, %250 : vector<32x128xf32>
    %252 = arith.minimumf %220, %251 : vector<32x128xf32>
    %c1_i32_105 = arith.constant 1 : i32
    %253 = tpu.dynamic_rotate %220 by %c1_i32_105 dim 1 : vector<32x128xf32>, i32 -> vector<32x128xf32>
    %cst_106 = arith.constant 0x7F800000 : f32
    %254 = vector.broadcast %cst_106 : f32 to vector<32x128xf32>
    %255 = arith.select %42, %254, %253 : vector<32x128xi1>, vector<32x128xf32>
    %c127_i32_107 = arith.constant 127 : i32
    %256 = tpu.dynamic_rotate %220 by %c127_i32_107 dim 1 : vector<32x128xf32>, i32 -> vector<32x128xf32>
    %cst_108 = arith.constant 0x7F800000 : f32
    %257 = vector.broadcast %cst_108 : f32 to vector<32x128xf32>
    %258 = arith.select %44, %257, %256 : vector<32x128xi1>, vector<32x128xf32>
    %259 = arith.minimumf %255, %258 : vector<32x128xf32>
    %260 = arith.minimumf %220, %259 : vector<32x128xf32>
    %261 = arith.minimumf %252, %260 : vector<32x128xf32>
    %c1_i32_109 = arith.constant 1 : i32
    %262 = tpu.dynamic_rotate %261 by %c1_i32_109 dim 0 : vector<32x128xf32>, i32 -> vector<32x128xf32>
    %cst_110 = arith.constant 0xFF800000 : f32
    %263 = vector.broadcast %cst_110 : f32 to vector<32x128xf32>
    %264 = arith.select %38, %263, %262 : vector<32x128xi1>, vector<32x128xf32>
    %c31_i32_111 = arith.constant 31 : i32
    %265 = tpu.dynamic_rotate %261 by %c31_i32_111 dim 0 : vector<32x128xf32>, i32 -> vector<32x128xf32>
    %cst_112 = arith.constant 0xFF800000 : f32
    %266 = vector.broadcast %cst_112 : f32 to vector<32x128xf32>
    %267 = arith.select %40, %266, %265 : vector<32x128xi1>, vector<32x128xf32>
    %268 = arith.maximumf %264, %267 : vector<32x128xf32>
    %269 = arith.maximumf %261, %268 : vector<32x128xf32>
    %c1_i32_113 = arith.constant 1 : i32
    %270 = tpu.dynamic_rotate %269 by %c1_i32_113 dim 1 : vector<32x128xf32>, i32 -> vector<32x128xf32>
    %cst_114 = arith.constant 0xFF800000 : f32
    %271 = vector.broadcast %cst_114 : f32 to vector<32x128xf32>
    %272 = arith.select %42, %271, %270 : vector<32x128xi1>, vector<32x128xf32>
    %c127_i32_115 = arith.constant 127 : i32
    %273 = tpu.dynamic_rotate %269 by %c127_i32_115 dim 1 : vector<32x128xf32>, i32 -> vector<32x128xf32>
    %cst_116 = arith.constant 0xFF800000 : f32
    %274 = vector.broadcast %cst_116 : f32 to vector<32x128xf32>
    %275 = arith.select %44, %274, %273 : vector<32x128xi1>, vector<32x128xf32>
    %276 = arith.maximumf %272, %275 : vector<32x128xf32>
    %277 = arith.maximumf %269, %276 : vector<32x128xf32>
    %278 = arith.subf %220, %277 : vector<32x128xf32>
    %cst_117 = arith.constant 0.000000e+00 : f32
    %279 = vector.broadcast %cst_117 : f32 to vector<32x128xf32>
    %280 = arith.maximumf %278, %279 : vector<32x128xf32>
    %281 = arith.mulf %244, %280 : vector<32x128xf32>
    %282 = arith.subf %280, %281 : vector<32x128xf32>
    %cst_118 = arith.constant 0.000000e+00 : f32
    %283 = vector.broadcast %cst_118 : f32 to vector<32x128xf32>
    %284 = arith.maximumf %282, %283 : vector<32x128xf32>
    %285 = arith.addf %244, %284 : vector<32x128xf32>
    %c1_i32_119 = arith.constant 1 : i32
    %286 = tpu.dynamic_rotate %261 by %c1_i32_119 dim 0 : vector<32x128xf32>, i32 -> vector<32x128xf32>
    %cst_120 = arith.constant 0x7F800000 : f32
    %287 = vector.broadcast %cst_120 : f32 to vector<32x128xf32>
    %288 = arith.select %38, %287, %286 : vector<32x128xi1>, vector<32x128xf32>
    %c31_i32_121 = arith.constant 31 : i32
    %289 = tpu.dynamic_rotate %261 by %c31_i32_121 dim 0 : vector<32x128xf32>, i32 -> vector<32x128xf32>
    %cst_122 = arith.constant 0x7F800000 : f32
    %290 = vector.broadcast %cst_122 : f32 to vector<32x128xf32>
    %291 = arith.select %40, %290, %289 : vector<32x128xi1>, vector<32x128xf32>
    %292 = arith.minimumf %288, %291 : vector<32x128xf32>
    %293 = arith.minimumf %261, %292 : vector<32x128xf32>
    %c1_i32_123 = arith.constant 1 : i32
    %294 = tpu.dynamic_rotate %261 by %c1_i32_123 dim 1 : vector<32x128xf32>, i32 -> vector<32x128xf32>
    %cst_124 = arith.constant 0x7F800000 : f32
    %295 = vector.broadcast %cst_124 : f32 to vector<32x128xf32>
    %296 = arith.select %42, %295, %294 : vector<32x128xi1>, vector<32x128xf32>
    %c127_i32_125 = arith.constant 127 : i32
    %297 = tpu.dynamic_rotate %261 by %c127_i32_125 dim 1 : vector<32x128xf32>, i32 -> vector<32x128xf32>
    %cst_126 = arith.constant 0x7F800000 : f32
    %298 = vector.broadcast %cst_126 : f32 to vector<32x128xf32>
    %299 = arith.select %44, %298, %297 : vector<32x128xi1>, vector<32x128xf32>
    %300 = arith.minimumf %296, %299 : vector<32x128xf32>
    %301 = arith.minimumf %261, %300 : vector<32x128xf32>
    %302 = arith.minimumf %293, %301 : vector<32x128xf32>
    %c1_i32_127 = arith.constant 1 : i32
    %303 = tpu.dynamic_rotate %302 by %c1_i32_127 dim 0 : vector<32x128xf32>, i32 -> vector<32x128xf32>
    %cst_128 = arith.constant 0xFF800000 : f32
    %304 = vector.broadcast %cst_128 : f32 to vector<32x128xf32>
    %305 = arith.select %38, %304, %303 : vector<32x128xi1>, vector<32x128xf32>
    %c31_i32_129 = arith.constant 31 : i32
    %306 = tpu.dynamic_rotate %302 by %c31_i32_129 dim 0 : vector<32x128xf32>, i32 -> vector<32x128xf32>
    %cst_130 = arith.constant 0xFF800000 : f32
    %307 = vector.broadcast %cst_130 : f32 to vector<32x128xf32>
    %308 = arith.select %40, %307, %306 : vector<32x128xi1>, vector<32x128xf32>
    %309 = arith.maximumf %305, %308 : vector<32x128xf32>
    %310 = arith.maximumf %302, %309 : vector<32x128xf32>
    %c1_i32_131 = arith.constant 1 : i32
    %311 = tpu.dynamic_rotate %310 by %c1_i32_131 dim 1 : vector<32x128xf32>, i32 -> vector<32x128xf32>
    %cst_132 = arith.constant 0xFF800000 : f32
    %312 = vector.broadcast %cst_132 : f32 to vector<32x128xf32>
    %313 = arith.select %42, %312, %311 : vector<32x128xi1>, vector<32x128xf32>
    %c127_i32_133 = arith.constant 127 : i32
    %314 = tpu.dynamic_rotate %310 by %c127_i32_133 dim 1 : vector<32x128xf32>, i32 -> vector<32x128xf32>
    %cst_134 = arith.constant 0xFF800000 : f32
    %315 = vector.broadcast %cst_134 : f32 to vector<32x128xf32>
    %316 = arith.select %44, %315, %314 : vector<32x128xi1>, vector<32x128xf32>
    %317 = arith.maximumf %313, %316 : vector<32x128xf32>
    %318 = arith.maximumf %310, %317 : vector<32x128xf32>
    %319 = arith.subf %261, %318 : vector<32x128xf32>
    %cst_135 = arith.constant 0.000000e+00 : f32
    %320 = vector.broadcast %cst_135 : f32 to vector<32x128xf32>
    %321 = arith.maximumf %319, %320 : vector<32x128xf32>
    %322 = arith.mulf %285, %321 : vector<32x128xf32>
    %323 = arith.subf %321, %322 : vector<32x128xf32>
    %cst_136 = arith.constant 0.000000e+00 : f32
    %324 = vector.broadcast %cst_136 : f32 to vector<32x128xf32>
    %325 = arith.maximumf %323, %324 : vector<32x128xf32>
    %326 = arith.addf %285, %325 : vector<32x128xf32>
    %c1_i32_137 = arith.constant 1 : i32
    %327 = tpu.dynamic_rotate %302 by %c1_i32_137 dim 0 : vector<32x128xf32>, i32 -> vector<32x128xf32>
    %cst_138 = arith.constant 0x7F800000 : f32
    %328 = vector.broadcast %cst_138 : f32 to vector<32x128xf32>
    %329 = arith.select %38, %328, %327 : vector<32x128xi1>, vector<32x128xf32>
    %c31_i32_139 = arith.constant 31 : i32
    %330 = tpu.dynamic_rotate %302 by %c31_i32_139 dim 0 : vector<32x128xf32>, i32 -> vector<32x128xf32>
    %cst_140 = arith.constant 0x7F800000 : f32
    %331 = vector.broadcast %cst_140 : f32 to vector<32x128xf32>
    %332 = arith.select %40, %331, %330 : vector<32x128xi1>, vector<32x128xf32>
    %333 = arith.minimumf %329, %332 : vector<32x128xf32>
    %334 = arith.minimumf %302, %333 : vector<32x128xf32>
    %c1_i32_141 = arith.constant 1 : i32
    %335 = tpu.dynamic_rotate %302 by %c1_i32_141 dim 1 : vector<32x128xf32>, i32 -> vector<32x128xf32>
    %cst_142 = arith.constant 0x7F800000 : f32
    %336 = vector.broadcast %cst_142 : f32 to vector<32x128xf32>
    %337 = arith.select %42, %336, %335 : vector<32x128xi1>, vector<32x128xf32>
    %c127_i32_143 = arith.constant 127 : i32
    %338 = tpu.dynamic_rotate %302 by %c127_i32_143 dim 1 : vector<32x128xf32>, i32 -> vector<32x128xf32>
    %cst_144 = arith.constant 0x7F800000 : f32
    %339 = vector.broadcast %cst_144 : f32 to vector<32x128xf32>
    %340 = arith.select %44, %339, %338 : vector<32x128xi1>, vector<32x128xf32>
    %341 = arith.minimumf %337, %340 : vector<32x128xf32>
    %342 = arith.minimumf %302, %341 : vector<32x128xf32>
    %343 = arith.minimumf %334, %342 : vector<32x128xf32>
    %c1_i32_145 = arith.constant 1 : i32
    %344 = tpu.dynamic_rotate %343 by %c1_i32_145 dim 0 : vector<32x128xf32>, i32 -> vector<32x128xf32>
    %cst_146 = arith.constant 0xFF800000 : f32
    %345 = vector.broadcast %cst_146 : f32 to vector<32x128xf32>
    %346 = arith.select %38, %345, %344 : vector<32x128xi1>, vector<32x128xf32>
    %c31_i32_147 = arith.constant 31 : i32
    %347 = tpu.dynamic_rotate %343 by %c31_i32_147 dim 0 : vector<32x128xf32>, i32 -> vector<32x128xf32>
    %cst_148 = arith.constant 0xFF800000 : f32
    %348 = vector.broadcast %cst_148 : f32 to vector<32x128xf32>
    %349 = arith.select %40, %348, %347 : vector<32x128xi1>, vector<32x128xf32>
    %350 = arith.maximumf %346, %349 : vector<32x128xf32>
    %351 = arith.maximumf %343, %350 : vector<32x128xf32>
    %c1_i32_149 = arith.constant 1 : i32
    %352 = tpu.dynamic_rotate %351 by %c1_i32_149 dim 1 : vector<32x128xf32>, i32 -> vector<32x128xf32>
    %cst_150 = arith.constant 0xFF800000 : f32
    %353 = vector.broadcast %cst_150 : f32 to vector<32x128xf32>
    %354 = arith.select %42, %353, %352 : vector<32x128xi1>, vector<32x128xf32>
    %c127_i32_151 = arith.constant 127 : i32
    %355 = tpu.dynamic_rotate %351 by %c127_i32_151 dim 1 : vector<32x128xf32>, i32 -> vector<32x128xf32>
    %cst_152 = arith.constant 0xFF800000 : f32
    %356 = vector.broadcast %cst_152 : f32 to vector<32x128xf32>
    %357 = arith.select %44, %356, %355 : vector<32x128xi1>, vector<32x128xf32>
    %358 = arith.maximumf %354, %357 : vector<32x128xf32>
    %359 = arith.maximumf %351, %358 : vector<32x128xf32>
    %360 = arith.subf %302, %359 : vector<32x128xf32>
    %cst_153 = arith.constant 0.000000e+00 : f32
    %361 = vector.broadcast %cst_153 : f32 to vector<32x128xf32>
    %362 = arith.maximumf %360, %361 : vector<32x128xf32>
    %363 = arith.mulf %326, %362 : vector<32x128xf32>
    %364 = arith.subf %362, %363 : vector<32x128xf32>
    %cst_154 = arith.constant 0.000000e+00 : f32
    %365 = vector.broadcast %cst_154 : f32 to vector<32x128xf32>
    %366 = arith.maximumf %364, %365 : vector<32x128xf32>
    %367 = arith.addf %326, %366 : vector<32x128xf32>
    %c1_i32_155 = arith.constant 1 : i32
    %368 = tpu.dynamic_rotate %343 by %c1_i32_155 dim 0 : vector<32x128xf32>, i32 -> vector<32x128xf32>
    %cst_156 = arith.constant 0x7F800000 : f32
    %369 = vector.broadcast %cst_156 : f32 to vector<32x128xf32>
    %370 = arith.select %38, %369, %368 : vector<32x128xi1>, vector<32x128xf32>
    %c31_i32_157 = arith.constant 31 : i32
    %371 = tpu.dynamic_rotate %343 by %c31_i32_157 dim 0 : vector<32x128xf32>, i32 -> vector<32x128xf32>
    %cst_158 = arith.constant 0x7F800000 : f32
    %372 = vector.broadcast %cst_158 : f32 to vector<32x128xf32>
    %373 = arith.select %40, %372, %371 : vector<32x128xi1>, vector<32x128xf32>
    %374 = arith.minimumf %370, %373 : vector<32x128xf32>
    %375 = arith.minimumf %343, %374 : vector<32x128xf32>
    %c1_i32_159 = arith.constant 1 : i32
    %376 = tpu.dynamic_rotate %343 by %c1_i32_159 dim 1 : vector<32x128xf32>, i32 -> vector<32x128xf32>
    %cst_160 = arith.constant 0x7F800000 : f32
    %377 = vector.broadcast %cst_160 : f32 to vector<32x128xf32>
    %378 = arith.select %42, %377, %376 : vector<32x128xi1>, vector<32x128xf32>
    %c127_i32_161 = arith.constant 127 : i32
    %379 = tpu.dynamic_rotate %343 by %c127_i32_161 dim 1 : vector<32x128xf32>, i32 -> vector<32x128xf32>
    %cst_162 = arith.constant 0x7F800000 : f32
    %380 = vector.broadcast %cst_162 : f32 to vector<32x128xf32>
    %381 = arith.select %44, %380, %379 : vector<32x128xi1>, vector<32x128xf32>
    %382 = arith.minimumf %378, %381 : vector<32x128xf32>
    %383 = arith.minimumf %343, %382 : vector<32x128xf32>
    %384 = arith.minimumf %375, %383 : vector<32x128xf32>
    %c1_i32_163 = arith.constant 1 : i32
    %385 = tpu.dynamic_rotate %384 by %c1_i32_163 dim 0 : vector<32x128xf32>, i32 -> vector<32x128xf32>
    %cst_164 = arith.constant 0xFF800000 : f32
    %386 = vector.broadcast %cst_164 : f32 to vector<32x128xf32>
    %387 = arith.select %38, %386, %385 : vector<32x128xi1>, vector<32x128xf32>
    %c31_i32_165 = arith.constant 31 : i32
    %388 = tpu.dynamic_rotate %384 by %c31_i32_165 dim 0 : vector<32x128xf32>, i32 -> vector<32x128xf32>
    %cst_166 = arith.constant 0xFF800000 : f32
    %389 = vector.broadcast %cst_166 : f32 to vector<32x128xf32>
    %390 = arith.select %40, %389, %388 : vector<32x128xi1>, vector<32x128xf32>
    %391 = arith.maximumf %387, %390 : vector<32x128xf32>
    %392 = arith.maximumf %384, %391 : vector<32x128xf32>
    %c1_i32_167 = arith.constant 1 : i32
    %393 = tpu.dynamic_rotate %392 by %c1_i32_167 dim 1 : vector<32x128xf32>, i32 -> vector<32x128xf32>
    %cst_168 = arith.constant 0xFF800000 : f32
    %394 = vector.broadcast %cst_168 : f32 to vector<32x128xf32>
    %395 = arith.select %42, %394, %393 : vector<32x128xi1>, vector<32x128xf32>
    %c127_i32_169 = arith.constant 127 : i32
    %396 = tpu.dynamic_rotate %392 by %c127_i32_169 dim 1 : vector<32x128xf32>, i32 -> vector<32x128xf32>
    %cst_170 = arith.constant 0xFF800000 : f32
    %397 = vector.broadcast %cst_170 : f32 to vector<32x128xf32>
    %398 = arith.select %44, %397, %396 : vector<32x128xi1>, vector<32x128xf32>
    %399 = arith.maximumf %395, %398 : vector<32x128xf32>
    %400 = arith.maximumf %392, %399 : vector<32x128xf32>
    %401 = arith.subf %343, %400 : vector<32x128xf32>
    %cst_171 = arith.constant 0.000000e+00 : f32
    %402 = vector.broadcast %cst_171 : f32 to vector<32x128xf32>
    %403 = arith.maximumf %401, %402 : vector<32x128xf32>
    %404 = arith.mulf %367, %403 : vector<32x128xf32>
    %405 = arith.subf %403, %404 : vector<32x128xf32>
    %cst_172 = arith.constant 0.000000e+00 : f32
    %406 = vector.broadcast %cst_172 : f32 to vector<32x128xf32>
    %407 = arith.maximumf %405, %406 : vector<32x128xf32>
    %408 = arith.addf %367, %407 : vector<32x128xf32>
    %c1_i32_173 = arith.constant 1 : i32
    %409 = tpu.dynamic_rotate %384 by %c1_i32_173 dim 0 : vector<32x128xf32>, i32 -> vector<32x128xf32>
    %cst_174 = arith.constant 0x7F800000 : f32
    %410 = vector.broadcast %cst_174 : f32 to vector<32x128xf32>
    %411 = arith.select %38, %410, %409 : vector<32x128xi1>, vector<32x128xf32>
    %c31_i32_175 = arith.constant 31 : i32
    %412 = tpu.dynamic_rotate %384 by %c31_i32_175 dim 0 : vector<32x128xf32>, i32 -> vector<32x128xf32>
    %cst_176 = arith.constant 0x7F800000 : f32
    %413 = vector.broadcast %cst_176 : f32 to vector<32x128xf32>
    %414 = arith.select %40, %413, %412 : vector<32x128xi1>, vector<32x128xf32>
    %415 = arith.minimumf %411, %414 : vector<32x128xf32>
    %416 = arith.minimumf %384, %415 : vector<32x128xf32>
    %c1_i32_177 = arith.constant 1 : i32
    %417 = tpu.dynamic_rotate %384 by %c1_i32_177 dim 1 : vector<32x128xf32>, i32 -> vector<32x128xf32>
    %cst_178 = arith.constant 0x7F800000 : f32
    %418 = vector.broadcast %cst_178 : f32 to vector<32x128xf32>
    %419 = arith.select %42, %418, %417 : vector<32x128xi1>, vector<32x128xf32>
    %c127_i32_179 = arith.constant 127 : i32
    %420 = tpu.dynamic_rotate %384 by %c127_i32_179 dim 1 : vector<32x128xf32>, i32 -> vector<32x128xf32>
    %cst_180 = arith.constant 0x7F800000 : f32
    %421 = vector.broadcast %cst_180 : f32 to vector<32x128xf32>
    %422 = arith.select %44, %421, %420 : vector<32x128xi1>, vector<32x128xf32>
    %423 = arith.minimumf %419, %422 : vector<32x128xf32>
    %424 = arith.minimumf %384, %423 : vector<32x128xf32>
    %425 = arith.minimumf %416, %424 : vector<32x128xf32>
    %c1_i32_181 = arith.constant 1 : i32
    %426 = tpu.dynamic_rotate %425 by %c1_i32_181 dim 0 : vector<32x128xf32>, i32 -> vector<32x128xf32>
    %cst_182 = arith.constant 0xFF800000 : f32
    %427 = vector.broadcast %cst_182 : f32 to vector<32x128xf32>
    %428 = arith.select %38, %427, %426 : vector<32x128xi1>, vector<32x128xf32>
    %c31_i32_183 = arith.constant 31 : i32
    %429 = tpu.dynamic_rotate %425 by %c31_i32_183 dim 0 : vector<32x128xf32>, i32 -> vector<32x128xf32>
    %cst_184 = arith.constant 0xFF800000 : f32
    %430 = vector.broadcast %cst_184 : f32 to vector<32x128xf32>
    %431 = arith.select %40, %430, %429 : vector<32x128xi1>, vector<32x128xf32>
    %432 = arith.maximumf %428, %431 : vector<32x128xf32>
    %433 = arith.maximumf %425, %432 : vector<32x128xf32>
    %c1_i32_185 = arith.constant 1 : i32
    %434 = tpu.dynamic_rotate %433 by %c1_i32_185 dim 1 : vector<32x128xf32>, i32 -> vector<32x128xf32>
    %cst_186 = arith.constant 0xFF800000 : f32
    %435 = vector.broadcast %cst_186 : f32 to vector<32x128xf32>
    %436 = arith.select %42, %435, %434 : vector<32x128xi1>, vector<32x128xf32>
    %c127_i32_187 = arith.constant 127 : i32
    %437 = tpu.dynamic_rotate %433 by %c127_i32_187 dim 1 : vector<32x128xf32>, i32 -> vector<32x128xf32>
    %cst_188 = arith.constant 0xFF800000 : f32
    %438 = vector.broadcast %cst_188 : f32 to vector<32x128xf32>
    %439 = arith.select %44, %438, %437 : vector<32x128xi1>, vector<32x128xf32>
    %440 = arith.maximumf %436, %439 : vector<32x128xf32>
    %441 = arith.maximumf %433, %440 : vector<32x128xf32>
    %442 = arith.subf %384, %441 : vector<32x128xf32>
    %cst_189 = arith.constant 0.000000e+00 : f32
    %443 = vector.broadcast %cst_189 : f32 to vector<32x128xf32>
    %444 = arith.maximumf %442, %443 : vector<32x128xf32>
    %445 = arith.mulf %408, %444 : vector<32x128xf32>
    %446 = arith.subf %444, %445 : vector<32x128xf32>
    %cst_190 = arith.constant 0.000000e+00 : f32
    %447 = vector.broadcast %cst_190 : f32 to vector<32x128xf32>
    %448 = arith.maximumf %446, %447 : vector<32x128xf32>
    %449 = arith.addf %408, %448 : vector<32x128xf32>
    %c1_i32_191 = arith.constant 1 : i32
    %450 = tpu.dynamic_rotate %425 by %c1_i32_191 dim 0 : vector<32x128xf32>, i32 -> vector<32x128xf32>
    %cst_192 = arith.constant 0x7F800000 : f32
    %451 = vector.broadcast %cst_192 : f32 to vector<32x128xf32>
    %452 = arith.select %38, %451, %450 : vector<32x128xi1>, vector<32x128xf32>
    %c31_i32_193 = arith.constant 31 : i32
    %453 = tpu.dynamic_rotate %425 by %c31_i32_193 dim 0 : vector<32x128xf32>, i32 -> vector<32x128xf32>
    %cst_194 = arith.constant 0x7F800000 : f32
    %454 = vector.broadcast %cst_194 : f32 to vector<32x128xf32>
    %455 = arith.select %40, %454, %453 : vector<32x128xi1>, vector<32x128xf32>
    %456 = arith.minimumf %452, %455 : vector<32x128xf32>
    %457 = arith.minimumf %425, %456 : vector<32x128xf32>
    %c1_i32_195 = arith.constant 1 : i32
    %458 = tpu.dynamic_rotate %425 by %c1_i32_195 dim 1 : vector<32x128xf32>, i32 -> vector<32x128xf32>
    %cst_196 = arith.constant 0x7F800000 : f32
    %459 = vector.broadcast %cst_196 : f32 to vector<32x128xf32>
    %460 = arith.select %42, %459, %458 : vector<32x128xi1>, vector<32x128xf32>
    %c127_i32_197 = arith.constant 127 : i32
    %461 = tpu.dynamic_rotate %425 by %c127_i32_197 dim 1 : vector<32x128xf32>, i32 -> vector<32x128xf32>
    %cst_198 = arith.constant 0x7F800000 : f32
    %462 = vector.broadcast %cst_198 : f32 to vector<32x128xf32>
    %463 = arith.select %44, %462, %461 : vector<32x128xi1>, vector<32x128xf32>
    %464 = arith.minimumf %460, %463 : vector<32x128xf32>
    %465 = arith.minimumf %425, %464 : vector<32x128xf32>
    %466 = arith.minimumf %457, %465 : vector<32x128xf32>
    %c1_i32_199 = arith.constant 1 : i32
    %467 = tpu.dynamic_rotate %466 by %c1_i32_199 dim 0 : vector<32x128xf32>, i32 -> vector<32x128xf32>
    %cst_200 = arith.constant 0xFF800000 : f32
    %468 = vector.broadcast %cst_200 : f32 to vector<32x128xf32>
    %469 = arith.select %38, %468, %467 : vector<32x128xi1>, vector<32x128xf32>
    %c31_i32_201 = arith.constant 31 : i32
    %470 = tpu.dynamic_rotate %466 by %c31_i32_201 dim 0 : vector<32x128xf32>, i32 -> vector<32x128xf32>
    %cst_202 = arith.constant 0xFF800000 : f32
    %471 = vector.broadcast %cst_202 : f32 to vector<32x128xf32>
    %472 = arith.select %40, %471, %470 : vector<32x128xi1>, vector<32x128xf32>
    %473 = arith.maximumf %469, %472 : vector<32x128xf32>
    %474 = arith.maximumf %466, %473 : vector<32x128xf32>
    %c1_i32_203 = arith.constant 1 : i32
    %475 = tpu.dynamic_rotate %474 by %c1_i32_203 dim 1 : vector<32x128xf32>, i32 -> vector<32x128xf32>
    %cst_204 = arith.constant 0xFF800000 : f32
    %476 = vector.broadcast %cst_204 : f32 to vector<32x128xf32>
    %477 = arith.select %42, %476, %475 : vector<32x128xi1>, vector<32x128xf32>
    %c127_i32_205 = arith.constant 127 : i32
    %478 = tpu.dynamic_rotate %474 by %c127_i32_205 dim 1 : vector<32x128xf32>, i32 -> vector<32x128xf32>
    %cst_206 = arith.constant 0xFF800000 : f32
    %479 = vector.broadcast %cst_206 : f32 to vector<32x128xf32>
    %480 = arith.select %44, %479, %478 : vector<32x128xi1>, vector<32x128xf32>
    %481 = arith.maximumf %477, %480 : vector<32x128xf32>
    %482 = arith.maximumf %474, %481 : vector<32x128xf32>
    %483 = arith.subf %425, %482 : vector<32x128xf32>
    %cst_207 = arith.constant 0.000000e+00 : f32
    %484 = vector.broadcast %cst_207 : f32 to vector<32x128xf32>
    %485 = arith.maximumf %483, %484 : vector<32x128xf32>
    %486 = arith.mulf %449, %485 : vector<32x128xf32>
    %487 = arith.subf %485, %486 : vector<32x128xf32>
    %cst_208 = arith.constant 0.000000e+00 : f32
    %488 = vector.broadcast %cst_208 : f32 to vector<32x128xf32>
    %489 = arith.maximumf %487, %488 : vector<32x128xf32>
    %490 = arith.addf %449, %489 : vector<32x128xf32>
    %491 = vector.extract_strided_slice %490 {offsets = [0, 0], sizes = [16, 128], strides = [1, 1]} : vector<32x128xf32> to vector<16x128xf32>
    %492 = vector.extract_strided_slice %490 {offsets = [16, 0], sizes = [16, 128], strides = [1, 1]} : vector<32x128xf32> to vector<16x128xf32>
    %493 = arith.mulf %0, %1 : vector<16x128xf32>
    %cst_209 = arith.constant dense<0.000000e+00> : vector<128xf32>
    %494 = vector.multi_reduction <add>, %493, %cst_209 [0] : vector<16x128xf32> to vector<128xf32>
    %495 = vector.shape_cast %494 : vector<128xf32> to vector<1x128xf32>
    %cst_210 = arith.constant dense<0.000000e+00> : vector<128xf32>
    %496 = vector.multi_reduction <add>, %0, %cst_210 [0] : vector<16x128xf32> to vector<128xf32>
    %497 = vector.shape_cast %496 : vector<128xf32> to vector<1x128xf32>
    %cst_211 = arith.constant dense<0.000000e+00> : vector<128xf32>
    %498 = vector.multi_reduction <add>, %1, %cst_211 [0] : vector<16x128xf32> to vector<128xf32>
    %499 = vector.shape_cast %498 : vector<128xf32> to vector<1x128xf32>
    %500 = arith.mulf %492, %0 : vector<16x128xf32>
    %cst_212 = arith.constant dense<0.000000e+00> : vector<128xf32>
    %501 = vector.multi_reduction <add>, %500, %cst_212 [0] : vector<16x128xf32> to vector<128xf32>
    %502 = vector.shape_cast %501 : vector<128xf32> to vector<1x128xf32>
    %cst_213 = arith.constant dense<0.000000e+00> : vector<128xf32>
    %503 = vector.multi_reduction <add>, %492, %cst_213 [0] : vector<16x128xf32> to vector<128xf32>
    %504 = vector.shape_cast %503 : vector<128xf32> to vector<1x128xf32>
    %505 = arith.mulf %491, %1 : vector<16x128xf32>
    %cst_214 = arith.constant dense<0.000000e+00> : vector<128xf32>
    %506 = vector.multi_reduction <add>, %505, %cst_214 [0] : vector<16x128xf32> to vector<128xf32>
    %507 = vector.shape_cast %506 : vector<128xf32> to vector<1x128xf32>
    %cst_215 = arith.constant dense<0.000000e+00> : vector<128xf32>
    %508 = vector.multi_reduction <add>, %491, %cst_215 [0] : vector<16x128xf32> to vector<128xf32>
    %509 = vector.shape_cast %508 : vector<128xf32> to vector<1x128xf32>
    %cst_216 = arith.constant 0.000000e+00 : f32
    %510 = vector.broadcast %cst_216 : f32 to vector<1x128xf32>
    %511 = tpu.concatenate %495, %497, %499, %502, %504, %507, %509, %510 in 0 : vector<1x128xf32>, vector<1x128xf32>, vector<1x128xf32>, vector<1x128xf32>, vector<1x128xf32>, vector<1x128xf32>, vector<1x128xf32>, vector<1x128xf32> -> vector<8x128xf32>
    %c0_217 = arith.constant 0 : index
    %c0_218 = arith.constant 0 : index
    %512 = vector.load %arg3[%c0_217, %c0_218] : memref<8x128xf32, #tpu.memory_space<vmem>>, vector<8x128xf32>
    tpu.vector_store %arg3[%c0_217, %c0_218], %511 {strides = array<i32>} : memref<8x128xf32, #tpu.memory_space<vmem>>, vector<8x128xf32>,
    return
  }
  func.func @transform_0(%arg0: i32) -> (i32, i32) {
    %c0_i32 = arith.constant 0 : i32
    %c0_i32_0 = arith.constant 0 : i32
    return %arg0, %c0_i32 : i32, i32
  }
  func.func @transform_1(%arg0: i32) -> (i32, i32) {
    %c0_i32 = arith.constant 0 : i32
    %c0_i32_0 = arith.constant 0 : i32
    return %arg0, %c0_i32 : i32, i32
  }
  func.func @transform_2(%arg0: i32) -> (i32, i32) {
    %c0_i32 = arith.constant 0 : i32
    %c0_i32_0 = arith.constant 0 : i32
    return %arg0, %c0_i32 : i32, i32
  }
}

</mosaic_0001>

<llo_original>
// kernel: tpu_custom_call.1
$region0: #{tpu_custom_call.1}
  #allocation0 [shape = 'u32[]', space=smem, size = 0x4, offset = 0x4, fixed_abs, tag = 'smem constant byte address 0x4 - core index']
  #allocation1 [shape = 'u32[144,128]{1,0:T(1,128)}', space=vmem, size = 0x12000, scoped, tag = 'internal scratch']
  %s0 = inlined_call_operand.hbm [shape: f32[16,128], index: 0, kind: input, shape index: {}]
  %s1 = inlined_call_operand.hbm [shape: f32[16,128], index: 1, kind: input, shape index: {}]
  %s2 = inlined_call_operand.hbm [shape: f32[8,128], index: 2, kind: output, shape index: {}]
  %s3 = sld [smem:[#allocation0]]
  $region26: #{tpu_custom_call.1} parent=0
    _
  %s5 = ssub.s32 1, %s3
  %s6 = scalar_select 0, %s5, %s3
  $region1: #{tpu_custom_call.1} parent=0
    #allocation2 [shape = 'u8[8192]{0}', space=vmem, size = 0x2000, scoped, tag = 'input window, operand 0, single buffered']
    #allocation3 [shape = 's32[1]{0}', space=sflag, size = 0x4, scoped, tag = 'scoped memory for tpu_custom_call.1']
    #allocation4 [shape = 's32[1]{0}', space=sflag, size = 0x4, scoped, tag = 'scoped memory for tpu_custom_call.1']
    #allocation5 [shape = 'u8[8192]{0}', space=vmem, size = 0x2000, scoped, tag = 'input window, operand 1, single buffered']
    #allocation6 [shape = 's32[1]{0}', space=sflag, size = 0x4, scoped, tag = 'scoped memory for tpu_custom_call.1']
    #allocation7 [shape = 'u8[4096]{0}', space=vmem, size = 0x1000, scoped, tag = 'output window, operand 0, single buffered']
    %7 = vsyncpa [#allocation3], 0
    %8 = vsyncpa [#allocation6], 0
    %9 = vsyncpa [#allocation4], 0
    // Predicated region
    $region2: #{tpu_custom_call.1} parent=1 // pred_check
      _
    $region3: #{tpu_custom_call.1} parent=1 // pred_check_branch
      %11 = sbr.rel (0) target = $region5
    $region4: #{tpu_custom_call.1} parent=1 // pred_region
      %s13 = ssub.s32 256, 256
      %14 = vsyncadd [#allocation3], %s13
      %s15 = sshll.u32 [#allocation2], 4
      %s16 = int_to_ptr.vmem [resolvable:$true] %s15
      %21 = dma.hbm_to_vmem [thread:$0]  %s0, 256, %s16, [#allocation3], 128, 128, 8
    $region5: #{tpu_custom_call.1} parent=1 // pred_fallthru
      _
    // Predicated region
    $region6: #{tpu_custom_call.1} parent=1 // pred_check
      _
    $region7: #{tpu_custom_call.1} parent=1 // pred_check_branch
      %23 = sbr.rel (0) target = $region9
    $region8: #{tpu_custom_call.1} parent=1 // pred_region
      %s25 = ssub.s32 256, 256
      %26 = vsyncadd [#allocation6], %s25
      %s27 = sshll.u32 [#allocation5], 4
      %s28 = int_to_ptr.vmem [resolvable:$true] %s27
      %33 = dma.hbm_to_vmem [thread:$0]  %s1, 256, %s28, [#allocation6], 128, 128, 8
    $region9: #{tpu_custom_call.1} parent=1 // pred_fallthru
      _
    // Predicated region
    $region10: #{tpu_custom_call.1} parent=1 // pred_check
      _
    $region11: #{tpu_custom_call.1} parent=1 // pred_check_branch
      %35 = sbr.rel (0) target = $region13
    $region12: #{tpu_custom_call.1} parent=1 // pred_region
      %36 = dma.done [#allocation3], 256
    $region13: #{tpu_custom_call.1} parent=1 // pred_fallthru
      _
    // Predicated region
    $region14: #{tpu_custom_call.1} parent=1 // pred_check
      _
    $region15: #{tpu_custom_call.1} parent=1 // pred_check_branch
      %38 = sbr.rel (0) target = $region17
    $region16: #{tpu_custom_call.1} parent=1 // pred_region
      %39 = dma.done [#allocation6], 256
    $region17: #{tpu_custom_call.1} parent=1 // pred_fallthru
      _
    %v40 = vld [vmem:[#allocation2] sm:$0xff]
    %v41 = vld [vmem:[#allocation2 + $0x8] sm:$0xff]
    %v42 = vld [vmem:[#allocation5] sm:$0xff]
    %v43 = vld [vmem:[#allocation5 + $0x8] sm:$0xff]
    %v44 = vlaneseq
    %v45 = vshrl.u32 %v44, 7
    %v46 = vadd.s32 %v45, 8
    %v47 = vadd.s32 %v45, 16
    %v48 = vadd.s32 %v45, 24
    %vm49 = vcmp.lt.s32.totalorder %v45, 0
    %v50 = vsub.s32 0, %v45
    %v51 = vsel %vm49, %v50, %v45
    %v52 = vshrl.u32 %v51, 4
    %v53 = vand.u32 %v51, 15
    %v54 = vsub.s32 0, %v53
    %v55 = vsel %vm49, %v54, %v53
    %vm56 = vcmp.lt.s32.totalorder %v46, 0
    %v57 = vsub.s32 0, %v46
    %v58 = vsel %vm56, %v57, %v46
    %v59 = vshrl.u32 %v58, 4
    %v60 = vand.u32 %v58, 15
    %v61 = vsub.s32 0, %v60
    %v62 = vsel %vm56, %v61, %v60
    %vm63 = vcmp.lt.s32.totalorder %v47, 0
    %v64 = vsub.s32 0, %v47
    %v65 = vsel %vm63, %v64, %v47
    %v66 = vshrl.u32 %v65, 4
    %v67 = vand.u32 %v65, 15
    %v68 = vsub.s32 0, %v67
    %v69 = vsel %vm63, %v68, %v67
    %vm70 = vcmp.lt.s32.totalorder %v48, 0
    %v71 = vsub.s32 0, %v48
    %v72 = vsel %vm70, %v71, %v48
    %v73 = vshrl.u32 %v72, 4
    %v74 = vand.u32 %v72, 15
    %v75 = vsub.s32 0, %v74
    %v76 = vsel %vm70, %v75, %v74
    %vm77 = vcmp.ne.s32.totalorder %v55, 0
    %vm78 = vcmp.ne.s32.totalorder %v62, 0
    %vm79 = vcmp.ne.s32.totalorder %v69, 0
    %vm80 = vcmp.ne.s32.totalorder %v76, 0
    %vm81 = vcmp.lt.s32.totalorder %v55, 0
    %vm82 = vcmp.lt.s32.totalorder %v62, 0
    %vm83 = vcmp.lt.s32.totalorder %v69, 0
    %vm84 = vcmp.lt.s32.totalorder %v76, 0
    %vm85 = vmand %vm81, %vm77
    %vm86 = vmand %vm82, %vm78
    %vm87 = vmand %vm83, %vm79
    %vm88 = vmand %vm84, %vm80
    %v89 = vadd.s32 %v55, 16
    %v90 = vadd.s32 %v62, 16
    %v91 = vadd.s32 %v69, 16
    %v92 = vadd.s32 %v76, 16
    %v93 = vsel %vm85, %v89, %v55
    %v94 = vsel %vm86, %v90, %v62
    %v95 = vsel %vm87, %v91, %v69
    %v96 = vsel %vm88, %v92, %v76
    %v97 = vlaneseq
    %v98 = vand.u32 %v97, 127
    %vm99 = vcmp.lt.s32.totalorder %v98, 0
    %v100 = vsub.s32 0, %v98
    %v101 = vsel %vm99, %v100, %v98
    %v102 = vshrl.u32 %v101, 4
    %v103 = vand.u32 %v101, 15
    %v104 = vsub.s32 0, %v103
    %v105 = vsel %vm99, %v104, %v103
    %vm106 = vcmp.ne.s32.totalorder %v105, 0
    %vm107 = vcmp.lt.s32.totalorder %v105, 0
    %vm108 = vmand %vm107, %vm106
    %v109 = vadd.s32 %v105, 16
    %v110 = vsel %vm108, %v109, %v105
    %vm111 = vcmp.eq.s32.totalorder %v93, 0
    %vm112 = vcmp.eq.s32.totalorder %v94, 0
    %vm113 = vcmp.eq.s32.totalorder %v95, 0
    %vm114 = vcmp.eq.s32.totalorder %v96, 0
    %vm115 = vcmp.eq.s32.totalorder %v93, 15
    %vm116 = vcmp.eq.s32.totalorder %v94, 15
    %vm117 = vcmp.eq.s32.totalorder %v95, 15
    %vm118 = vcmp.eq.s32.totalorder %v96, 15
    %vm119 = vcmp.eq.s32.totalorder %v110, 0
    %vm120 = vcmp.eq.s32.totalorder %v110, 15
    %v121 = vrot.slane %v40, 7
    %v122 = vrot.slane %v41, 7
    %v123 = vrot.slane %v42, 7
    %v124 = vrot.slane %v43, 7
    %vm125 = vcmp.lt.s32.totalorder %v45, 1
    %v126 = vsel %vm125, %v123, %v124
    %v127 = vsel %vm125, %v122, %v123
    %v128 = vsel %vm125, %v121, %v122
    %v129 = vsel %vm125, %v124, %v121
    %v130 = vsel %vm111, inf, %v129
    %v131 = vsel %vm112, inf, %v128
    %v132 = vsel %vm113, inf, %v127
    %v133 = vsel %vm114, inf, %v126
    %v134 = vrot.slane %v40, 1
    %v135 = vrot.slane %v41, 1
    %v136 = vrot.slane %v42, 1
    %v137 = vrot.slane %v43, 1
    %vm138 = vcmp.lt.s32.totalorder %v45, 7
    %v139 = vsel %vm138, %v136, %v137
    %v140 = vsel %vm138, %v135, %v136
    %v141 = vsel %vm138, %v134, %v135
    %v142 = vsel %vm138, %v137, %v134
    %v143 = vsel %vm115, inf, %v141
    %v144 = vsel %vm116, inf, %v140
    %v145 = vsel %vm117, inf, %v139
    %v146 = vsel %vm118, inf, %v142
    %v147 = vmin.f32 %v130, %v143
    %v148 = vmin.f32 %v131, %v144
    %v149 = vmin.f32 %v132, %v145
    %v150 = vmin.f32 %v133, %v146
    %v151 = vmin.f32 %v40, %v147
    %v152 = vmin.f32 %v41, %v148
    %v153 = vmin.f32 %v42, %v149
    %v154 = vmin.f32 %v43, %v150
    %155 = vrot.lane.b32.xlu0 %v40, 1
    %v156 = vpop.permute.xlu0 %155
    %157 = vrot.lane.b32.xlu0 %v41, 1
    %v158 = vpop.permute.xlu0 %157
    %159 = vrot.lane.b32.xlu0 %v42, 1
    %v160 = vpop.permute.xlu0 %159
    %161 = vrot.lane.b32.xlu0 %v43, 1
    %v162 = vpop.permute.xlu0 %161
    %v163 = vsel %vm119, inf, %v156
    %v164 = vsel %vm119, inf, %v158
    %v165 = vsel %vm119, inf, %v160
    %v166 = vsel %vm119, inf, %v162
    %167 = vrot.lane.b32.xlu0 %v40, 127
    %v168 = vpop.permute.xlu0 %167
    %169 = vrot.lane.b32.xlu0 %v41, 127
    %v170 = vpop.permute.xlu0 %169
    %171 = vrot.lane.b32.xlu0 %v42, 127
    %v172 = vpop.permute.xlu0 %171
    %173 = vrot.lane.b32.xlu0 %v43, 127
    %v174 = vpop.permute.xlu0 %173
    %v175 = vsel %vm120, inf, %v168
    %v176 = vsel %vm120, inf, %v170
    %v177 = vsel %vm120, inf, %v172
    %v178 = vsel %vm120, inf, %v174
    %v179 = vmin.f32 %v163, %v175
    %v180 = vmin.f32 %v164, %v176
    %v181 = vmin.f32 %v165, %v177
    %v182 = vmin.f32 %v166, %v178
    %v183 = vmin.f32 %v40, %v179
    %v184 = vmin.f32 %v41, %v180
    %v185 = vmin.f32 %v42, %v181
    %v186 = vmin.f32 %v43, %v182
    %v187 = vmin.f32 %v151, %v183
    %v188 = vmin.f32 %v152, %v184
    %v189 = vmin.f32 %v153, %v185
    %v190 = vmin.f32 %v154, %v186
    %v191 = vrot.slane %v187, 7
    %v192 = vrot.slane %v188, 7
    %v193 = vrot.slane %v189, 7
    %v194 = vrot.slane %v190, 7
    %v195 = vsel %vm125, %v193, %v194
    %v196 = vsel %vm125, %v192, %v193
    %v197 = vsel %vm125, %v191, %v192
    %v198 = vsel %vm125, %v194, %v191
    %v199 = vsel %vm111, -inf, %v198
    %v200 = vsel %vm112, -inf, %v197
    %v201 = vsel %vm113, -inf, %v196
    %v202 = vsel %vm114, -inf, %v195
    %v203 = vrot.slane %v187, 1
    %v204 = vrot.slane %v188, 1
    %v205 = vrot.slane %v189, 1
    %v206 = vrot.slane %v190, 1
    %v207 = vsel %vm138, %v205, %v206
    %v208 = vsel %vm138, %v204, %v205
    %v209 = vsel %vm138, %v203, %v204
    %v210 = vsel %vm138, %v206, %v203
    %v211 = vsel %vm115, -inf, %v209
    %v212 = vsel %vm116, -inf, %v208
    %v213 = vsel %vm117, -inf, %v207
    %v214 = vsel %vm118, -inf, %v210
    %v215 = vmax.f32 %v199, %v211
    %v216 = vmax.f32 %v200, %v212
    %v217 = vmax.f32 %v201, %v213
    %v218 = vmax.f32 %v202, %v214
    %v219 = vmax.f32 %v187, %v215
    %v220 = vmax.f32 %v188, %v216
    %v221 = vmax.f32 %v189, %v217
    %v222 = vmax.f32 %v190, %v218
    %223 = vrot.lane.b32.xlu0 %v219, 1
    %v224 = vpop.permute.xlu0 %223
    %225 = vrot.lane.b32.xlu0 %v220, 1
    %v226 = vpop.permute.xlu0 %225
    %227 = vrot.lane.b32.xlu0 %v221, 1
    %v228 = vpop.permute.xlu0 %227
    %229 = vrot.lane.b32.xlu0 %v222, 1
    %v230 = vpop.permute.xlu0 %229
    %v231 = vsel %vm119, -inf, %v224
    %v232 = vsel %vm119, -inf, %v226
    %v233 = vsel %vm119, -inf, %v228
    %v234 = vsel %vm119, -inf, %v230
    %235 = vrot.lane.b32.xlu0 %v219, 127
    %v236 = vpop.permute.xlu0 %235
    %237 = vrot.lane.b32.xlu0 %v220, 127
    %v238 = vpop.permute.xlu0 %237
    %239 = vrot.lane.b32.xlu0 %v221, 127
    %v240 = vpop.permute.xlu0 %239
    %241 = vrot.lane.b32.xlu0 %v222, 127
    %v242 = vpop.permute.xlu0 %241
    %v243 = vsel %vm120, -inf, %v236
    %v244 = vsel %vm120, -inf, %v238
    %v245 = vsel %vm120, -inf, %v240
    %v246 = vsel %vm120, -inf, %v242
    %v247 = vmax.f32 %v231, %v243
    %v248 = vmax.f32 %v232, %v244
    %v249 = vmax.f32 %v233, %v245
    %v250 = vmax.f32 %v234, %v246
    %v251 = vmax.f32 %v219, %v247
    %v252 = vmax.f32 %v220, %v248
    %v253 = vmax.f32 %v221, %v249
    %v254 = vmax.f32 %v222, %v250
    %v255 = vsub.f32 %v40, %v251
    %v256 = vsub.f32 %v41, %v252
    %v257 = vsub.f32 %v42, %v253
    %v258 = vsub.f32 %v43, %v254
    %v259 = vmax.f32 %v255, 0.0
    %v260 = vmax.f32 %v256, 0.0
    %v261 = vmax.f32 %v257, 0.0
    %v262 = vmax.f32 %v258, 0.0
    %v263 = vsel %vm111, inf, %v198
    %v264 = vsel %vm112, inf, %v197
    %v265 = vsel %vm113, inf, %v196
    %v266 = vsel %vm114, inf, %v195
    %v267 = vsel %vm115, inf, %v209
    %v268 = vsel %vm116, inf, %v208
    %v269 = vsel %vm117, inf, %v207
    %v270 = vsel %vm118, inf, %v210
    %v271 = vmin.f32 %v263, %v267
    %v272 = vmin.f32 %v264, %v268
    %v273 = vmin.f32 %v265, %v269
    %v274 = vmin.f32 %v266, %v270
    %v275 = vmin.f32 %v187, %v271
    %v276 = vmin.f32 %v188, %v272
    %v277 = vmin.f32 %v189, %v273
    %v278 = vmin.f32 %v190, %v274
    %279 = vrot.lane.b32.xlu0 %v187, 1
    %v280 = vpop.permute.xlu0 %279
    %281 = vrot.lane.b32.xlu0 %v188, 1
    %v282 = vpop.permute.xlu0 %281
    %283 = vrot.lane.b32.xlu0 %v189, 1
    %v284 = vpop.permute.xlu0 %283
    %285 = vrot.lane.b32.xlu0 %v190, 1
    %v286 = vpop.permute.xlu0 %285
    %v287 = vsel %vm119, inf, %v280
    %v288 = vsel %vm119, inf, %v282
    %v289 = vsel %vm119, inf, %v284
    %v290 = vsel %vm119, inf, %v286
    %291 = vrot.lane.b32.xlu0 %v187, 127
    %v292 = vpop.permute.xlu0 %291
    %293 = vrot.lane.b32.xlu0 %v188, 127
    %v294 = vpop.permute.xlu0 %293
    %295 = vrot.lane.b32.xlu0 %v189, 127
    %v296 = vpop.permute.xlu0 %295
    %297 = vrot.lane.b32.xlu0 %v190, 127
    %v298 = vpop.permute.xlu0 %297
    %v299 = vsel %vm120, inf, %v292
    %v300 = vsel %vm120, inf, %v294
    %v301 = vsel %vm120, inf, %v296
    %v302 = vsel %vm120, inf, %v298
    %v303 = vmin.f32 %v287, %v299
    %v304 = vmin.f32 %v288, %v300
    %v305 = vmin.f32 %v289, %v301
    %v306 = vmin.f32 %v290, %v302
    %v307 = vmin.f32 %v187, %v303
    %v308 = vmin.f32 %v188, %v304
    %v309 = vmin.f32 %v189, %v305
    %v310 = vmin.f32 %v190, %v306
    %v311 = vmin.f32 %v275, %v307
    %v312 = vmin.f32 %v276, %v308
    %v313 = vmin.f32 %v277, %v309
    %v314 = vmin.f32 %v278, %v310
    %v315 = vrot.slane %v311, 7
    %v316 = vrot.slane %v312, 7
    %v317 = vrot.slane %v313, 7
    %v318 = vrot.slane %v314, 7
    %v319 = vsel %vm125, %v317, %v318
    %v320 = vsel %vm125, %v316, %v317
    %v321 = vsel %vm125, %v315, %v316
    %v322 = vsel %vm125, %v318, %v315
    %v323 = vsel %vm111, -inf, %v322
    %v324 = vsel %vm112, -inf, %v321
    %v325 = vsel %vm113, -inf, %v320
    %v326 = vsel %vm114, -inf, %v319
    %v327 = vrot.slane %v311, 1
    %v328 = vrot.slane %v312, 1
    %v329 = vrot.slane %v313, 1
    %v330 = vrot.slane %v314, 1
    %v331 = vsel %vm138, %v329, %v330
    %v332 = vsel %vm138, %v328, %v329
    %v333 = vsel %vm138, %v327, %v328
    %v334 = vsel %vm138, %v330, %v327
    %v335 = vsel %vm115, -inf, %v333
    %v336 = vsel %vm116, -inf, %v332
    %v337 = vsel %vm117, -inf, %v331
    %v338 = vsel %vm118, -inf, %v334
    %v339 = vmax.f32 %v323, %v335
    %v340 = vmax.f32 %v324, %v336
    %v341 = vmax.f32 %v325, %v337
    %v342 = vmax.f32 %v326, %v338
    %v343 = vmax.f32 %v311, %v339
    %v344 = vmax.f32 %v312, %v340
    %v345 = vmax.f32 %v313, %v341
    %v346 = vmax.f32 %v314, %v342
    %347 = vrot.lane.b32.xlu0 %v343, 1
    %v348 = vpop.permute.xlu0 %347
    %349 = vrot.lane.b32.xlu0 %v344, 1
    %v350 = vpop.permute.xlu0 %349
    %351 = vrot.lane.b32.xlu0 %v345, 1
    %v352 = vpop.permute.xlu0 %351
    %353 = vrot.lane.b32.xlu0 %v346, 1
    %v354 = vpop.permute.xlu0 %353
    %v355 = vsel %vm119, -inf, %v348
    %v356 = vsel %vm119, -inf, %v350
    %v357 = vsel %vm119, -inf, %v352
    %v358 = vsel %vm119, -inf, %v354
    %359 = vrot.lane.b32.xlu0 %v343, 127
    %v360 = vpop.permute.xlu0 %359
    %361 = vrot.lane.b32.xlu0 %v344, 127
    %v362 = vpop.permute.xlu0 %361
    %363 = vrot.lane.b32.xlu0 %v345, 127
    %v364 = vpop.permute.xlu0 %363
    %365 = vrot.lane.b32.xlu0 %v346, 127
    %v366 = vpop.permute.xlu0 %365
    %v367 = vsel %vm120, -inf, %v360
    %v368 = vsel %vm120, -inf, %v362
    %v369 = vsel %vm120, -inf, %v364
    %v370 = vsel %vm120, -inf, %v366
    %v371 = vmax.f32 %v355, %v367
    %v372 = vmax.f32 %v356, %v368
    %v373 = vmax.f32 %v357, %v369
    %v374 = vmax.f32 %v358, %v370
    %v375 = vmax.f32 %v343, %v371
    %v376 = vmax.f32 %v344, %v372
    %v377 = vmax.f32 %v345, %v373
    %v378 = vmax.f32 %v346, %v374
    %v379 = vsub.f32 %v187, %v375
    %v380 = vsub.f32 %v188, %v376
    %v381 = vsub.f32 %v189, %v377
    %v382 = vsub.f32 %v190, %v378
    %v383 = vmax.f32 %v379, 0.0
    %v384 = vmax.f32 %v380, 0.0
    %v385 = vmax.f32 %v381, 0.0
    %v386 = vmax.f32 %v382, 0.0
    %v387 = vmul.f32 %v259, %v383
    %v388 = vmul.f32 %v260, %v384
    %v389 = vmul.f32 %v261, %v385
    %v390 = vmul.f32 %v262, %v386
    %v391 = vsub.f32 %v383, %v387
    %v392 = vsub.f32 %v384, %v388
    %v393 = vsub.f32 %v385, %v389
    %v394 = vsub.f32 %v386, %v390
    %v395 = vmax.f32 %v391, 0.0
    %v396 = vmax.f32 %v392, 0.0
    %v397 = vmax.f32 %v393, 0.0
    %v398 = vmax.f32 %v394, 0.0
    %v399 = vadd.f32 %v259, %v395
    %v400 = vadd.f32 %v260, %v396
    %v401 = vadd.f32 %v261, %v397
    %v402 = vadd.f32 %v262, %v398
    %v403 = vsel %vm111, inf, %v322
    %v404 = vsel %vm112, inf, %v321
    %v405 = vsel %vm113, inf, %v320
    %v406 = vsel %vm114, inf, %v319
    %v407 = vsel %vm115, inf, %v333
    %v408 = vsel %vm116, inf, %v332
    %v409 = vsel %vm117, inf, %v331
    %v410 = vsel %vm118, inf, %v334
    %v411 = vmin.f32 %v403, %v407
    %v412 = vmin.f32 %v404, %v408
    %v413 = vmin.f32 %v405, %v409
    %v414 = vmin.f32 %v406, %v410
    %v415 = vmin.f32 %v311, %v411
    %v416 = vmin.f32 %v312, %v412
    %v417 = vmin.f32 %v313, %v413
    %v418 = vmin.f32 %v314, %v414
    %419 = vrot.lane.b32.xlu0 %v311, 1
    %v420 = vpop.permute.xlu0 %419
    %421 = vrot.lane.b32.xlu0 %v312, 1
    %v422 = vpop.permute.xlu0 %421
    %423 = vrot.lane.b32.xlu0 %v313, 1
    %v424 = vpop.permute.xlu0 %423
    %425 = vrot.lane.b32.xlu0 %v314, 1
    %v426 = vpop.permute.xlu0 %425
    %v427 = vsel %vm119, inf, %v420
    %v428 = vsel %vm119, inf, %v422
    %v429 = vsel %vm119, inf, %v424
    %v430 = vsel %vm119, inf, %v426
    %431 = vrot.lane.b32.xlu0 %v311, 127
    %v432 = vpop.permute.xlu0 %431
    %433 = vrot.lane.b32.xlu0 %v312, 127
    %v434 = vpop.permute.xlu0 %433
    %435 = vrot.lane.b32.xlu0 %v313, 127
    %v436 = vpop.permute.xlu0 %435
    %437 = vrot.lane.b32.xlu0 %v314, 127
    %v438 = vpop.permute.xlu0 %437
    %v439 = vsel %vm120, inf, %v432
    %v440 = vsel %vm120, inf, %v434
    %v441 = vsel %vm120, inf, %v436
    %v442 = vsel %vm120, inf, %v438
    %v443 = vmin.f32 %v427, %v439
    %v444 = vmin.f32 %v428, %v440
    %v445 = vmin.f32 %v429, %v441
    %v446 = vmin.f32 %v430, %v442
    %v447 = vmin.f32 %v311, %v443
    %v448 = vmin.f32 %v312, %v444
    %v449 = vmin.f32 %v313, %v445
    %v450 = vmin.f32 %v314, %v446
    %v451 = vmin.f32 %v415, %v447
    %v452 = vmin.f32 %v416, %v448
    %v453 = vmin.f32 %v417, %v449
    %v454 = vmin.f32 %v418, %v450
    %v455 = vrot.slane %v451, 7
    %v456 = vrot.slane %v452, 7
    %v457 = vrot.slane %v453, 7
    %v458 = vrot.slane %v454, 7
    %v459 = vsel %vm125, %v457, %v458
    %v460 = vsel %vm125, %v456, %v457
    %v461 = vsel %vm125, %v455, %v456
    %v462 = vsel %vm125, %v458, %v455
    %v463 = vsel %vm111, -inf, %v462
    %v464 = vsel %vm112, -inf, %v461
    %v465 = vsel %vm113, -inf, %v460
    %v466 = vsel %vm114, -inf, %v459
    %v467 = vrot.slane %v451, 1
    %v468 = vrot.slane %v452, 1
    %v469 = vrot.slane %v453, 1
    %v470 = vrot.slane %v454, 1
    %v471 = vsel %vm138, %v469, %v470
    %v472 = vsel %vm138, %v468, %v469
    %v473 = vsel %vm138, %v467, %v468
    %v474 = vsel %vm138, %v470, %v467
    %v475 = vsel %vm115, -inf, %v473
    %v476 = vsel %vm116, -inf, %v472
    %v477 = vsel %vm117, -inf, %v471
    %v478 = vsel %vm118, -inf, %v474
    %v479 = vmax.f32 %v463, %v475
    %v480 = vmax.f32 %v464, %v476
    %v481 = vmax.f32 %v465, %v477
    %v482 = vmax.f32 %v466, %v478
    %v483 = vmax.f32 %v451, %v479
    %v484 = vmax.f32 %v452, %v480
    %v485 = vmax.f32 %v453, %v481
    %v486 = vmax.f32 %v454, %v482
    %487 = vrot.lane.b32.xlu0 %v483, 1
    %v488 = vpop.permute.xlu0 %487
    %489 = vrot.lane.b32.xlu0 %v484, 1
    %v490 = vpop.permute.xlu0 %489
    %491 = vrot.lane.b32.xlu0 %v485, 1
    %v492 = vpop.permute.xlu0 %491
    %493 = vrot.lane.b32.xlu0 %v486, 1
    %v494 = vpop.permute.xlu0 %493
    %v495 = vsel %vm119, -inf, %v488
    %v496 = vsel %vm119, -inf, %v490
    %v497 = vsel %vm119, -inf, %v492
    %v498 = vsel %vm119, -inf, %v494
    %499 = vrot.lane.b32.xlu0 %v483, 127
    %v500 = vpop.permute.xlu0 %499
    %501 = vrot.lane.b32.xlu0 %v484, 127
    %v502 = vpop.permute.xlu0 %501
    %503 = vrot.lane.b32.xlu0 %v485, 127
    %v504 = vpop.permute.xlu0 %503
    %505 = vrot.lane.b32.xlu0 %v486, 127
    %v506 = vpop.permute.xlu0 %505
    %v507 = vsel %vm120, -inf, %v500
    %v508 = vsel %vm120, -inf, %v502
    %v509 = vsel %vm120, -inf, %v504
    %v510 = vsel %vm120, -inf, %v506
    %v511 = vmax.f32 %v495, %v507
    %v512 = vmax.f32 %v496, %v508
    %v513 = vmax.f32 %v497, %v509
    %v514 = vmax.f32 %v498, %v510
    %v515 = vmax.f32 %v483, %v511
    %v516 = vmax.f32 %v484, %v512
    %v517 = vmax.f32 %v485, %v513
    %v518 = vmax.f32 %v486, %v514
    %v519 = vsub.f32 %v311, %v515
    %v520 = vsub.f32 %v312, %v516
    %v521 = vsub.f32 %v313, %v517
    %v522 = vsub.f32 %v314, %v518
    %v523 = vmax.f32 %v519, 0.0
    %v524 = vmax.f32 %v520, 0.0
    %v525 = vmax.f32 %v521, 0.0
    %v526 = vmax.f32 %v522, 0.0
    %v527 = vmul.f32 %v399, %v523
    %v528 = vmul.f32 %v400, %v524
    %v529 = vmul.f32 %v401, %v525
    %v530 = vmul.f32 %v402, %v526
    %v531 = vsub.f32 %v523, %v527
    %v532 = vsub.f32 %v524, %v528
    %v533 = vsub.f32 %v525, %v529
    %v534 = vsub.f32 %v526, %v530
    %v535 = vmax.f32 %v531, 0.0
    %v536 = vmax.f32 %v532, 0.0
    %v537 = vmax.f32 %v533, 0.0
    %v538 = vmax.f32 %v534, 0.0
    %v539 = vadd.f32 %v399, %v535
    %v540 = vadd.f32 %v400, %v536
    %v541 = vadd.f32 %v401, %v537
    %v542 = vadd.f32 %v402, %v538
    %v543 = vsel %vm111, inf, %v462
    %v544 = vsel %vm112, inf, %v461
    %v545 = vsel %vm113, inf, %v460
    %v546 = vsel %vm114, inf, %v459
    %v547 = vsel %vm115, inf, %v473
    %v548 = vsel %vm116, inf, %v472
    %v549 = vsel %vm117, inf, %v471
    %v550 = vsel %vm118, inf, %v474
    %v551 = vmin.f32 %v543, %v547
    %v552 = vmin.f32 %v544, %v548
    %v553 = vmin.f32 %v545, %v549
    %v554 = vmin.f32 %v546, %v550
    %v555 = vmin.f32 %v451, %v551
    %v556 = vmin.f32 %v452, %v552
    %v557 = vmin.f32 %v453, %v553
    %v558 = vmin.f32 %v454, %v554
    %559 = vrot.lane.b32.xlu0 %v451, 1
    %v560 = vpop.permute.xlu0 %559
    %561 = vrot.lane.b32.xlu0 %v452, 1
    %v562 = vpop.permute.xlu0 %561
    %563 = vrot.lane.b32.xlu0 %v453, 1
    %v564 = vpop.permute.xlu0 %563
    %565 = vrot.lane.b32.xlu0 %v454, 1
    %v566 = vpop.permute.xlu0 %565
    %v567 = vsel %vm119, inf, %v560
    %v568 = vsel %vm119, inf, %v562
    %v569 = vsel %vm119, inf, %v564
    %v570 = vsel %vm119, inf, %v566
    %571 = vrot.lane.b32.xlu0 %v451, 127
    %v572 = vpop.permute.xlu0 %571
    %573 = vrot.lane.b32.xlu0 %v452, 127
    %v574 = vpop.permute.xlu0 %573
    %575 = vrot.lane.b32.xlu0 %v453, 127
    %v576 = vpop.permute.xlu0 %575
    %577 = vrot.lane.b32.xlu0 %v454, 127
    %v578 = vpop.permute.xlu0 %577
    %v579 = vsel %vm120, inf, %v572
    %v580 = vsel %vm120, inf, %v574
    %v581 = vsel %vm120, inf, %v576
    %v582 = vsel %vm120, inf, %v578
    %v583 = vmin.f32 %v567, %v579
    %v584 = vmin.f32 %v568, %v580
    %v585 = vmin.f32 %v569, %v581
    %v586 = vmin.f32 %v570, %v582
    %v587 = vmin.f32 %v451, %v583
    %v588 = vmin.f32 %v452, %v584
    %v589 = vmin.f32 %v453, %v585
    %v590 = vmin.f32 %v454, %v586
    %v591 = vmin.f32 %v555, %v587
    %v592 = vmin.f32 %v556, %v588
    %v593 = vmin.f32 %v557, %v589
    %v594 = vmin.f32 %v558, %v590
    %v595 = vrot.slane %v591, 7
    %v596 = vrot.slane %v592, 7
    %v597 = vrot.slane %v593, 7
    %v598 = vrot.slane %v594, 7
    %v599 = vsel %vm125, %v597, %v598
    %v600 = vsel %vm125, %v596, %v597
    %v601 = vsel %vm125, %v595, %v596
    %v602 = vsel %vm125, %v598, %v595
    %v603 = vsel %vm111, -inf, %v602
    %v604 = vsel %vm112, -inf, %v601
    %v605 = vsel %vm113, -inf, %v600
    %v606 = vsel %vm114, -inf, %v599
    %v607 = vrot.slane %v591, 1
    %v608 = vrot.slane %v592, 1
    %v609 = vrot.slane %v593, 1
    %v610 = vrot.slane %v594, 1
    %v611 = vsel %vm138, %v609, %v610
    %v612 = vsel %vm138, %v608, %v609
    %v613 = vsel %vm138, %v607, %v608
    %v614 = vsel %vm138, %v610, %v607
    %v615 = vsel %vm115, -inf, %v613
    %v616 = vsel %vm116, -inf, %v612
    %v617 = vsel %vm117, -inf, %v611
    %v618 = vsel %vm118, -inf, %v614
    %v619 = vmax.f32 %v603, %v615
    %v620 = vmax.f32 %v604, %v616
    %v621 = vmax.f32 %v605, %v617
    %v622 = vmax.f32 %v606, %v618
    %v623 = vmax.f32 %v591, %v619
    %v624 = vmax.f32 %v592, %v620
    %v625 = vmax.f32 %v593, %v621
    %v626 = vmax.f32 %v594, %v622
    %627 = vrot.lane.b32.xlu0 %v623, 1
    %v628 = vpop.permute.xlu0 %627
    %629 = vrot.lane.b32.xlu0 %v624, 1
    %v630 = vpop.permute.xlu0 %629
    %631 = vrot.lane.b32.xlu0 %v625, 1
    %v632 = vpop.permute.xlu0 %631
    %633 = vrot.lane.b32.xlu0 %v626, 1
    %v634 = vpop.permute.xlu0 %633
    %v635 = vsel %vm119, -inf, %v628
    %v636 = vsel %vm119, -inf, %v630
    %v637 = vsel %vm119, -inf, %v632
    %v638 = vsel %vm119, -inf, %v634
    %639 = vrot.lane.b32.xlu0 %v623, 127
    %v640 = vpop.permute.xlu0 %639
    %641 = vrot.lane.b32.xlu0 %v624, 127
    %v642 = vpop.permute.xlu0 %641
    %643 = vrot.lane.b32.xlu0 %v625, 127
    %v644 = vpop.permute.xlu0 %643
    %645 = vrot.lane.b32.xlu0 %v626, 127
    %v646 = vpop.permute.xlu0 %645
    %v647 = vsel %vm120, -inf, %v640
    %v648 = vsel %vm120, -inf, %v642
    %v649 = vsel %vm120, -inf, %v644
    %v650 = vsel %vm120, -inf, %v646
    %v651 = vmax.f32 %v635, %v647
    %v652 = vmax.f32 %v636, %v648
    %v653 = vmax.f32 %v637, %v649
    %v654 = vmax.f32 %v638, %v650
    %v655 = vmax.f32 %v623, %v651
    %v656 = vmax.f32 %v624, %v652
    %v657 = vmax.f32 %v625, %v653
    %v658 = vmax.f32 %v626, %v654
    %v659 = vsub.f32 %v451, %v655
    %v660 = vsub.f32 %v452, %v656
    %v661 = vsub.f32 %v453, %v657
    %v662 = vsub.f32 %v454, %v658
    %v663 = vmax.f32 %v659, 0.0
    %v664 = vmax.f32 %v660, 0.0
    %v665 = vmax.f32 %v661, 0.0
    %v666 = vmax.f32 %v662, 0.0
    %v667 = vmul.f32 %v539, %v663
    %v668 = vmul.f32 %v540, %v664
    %v669 = vmul.f32 %v541, %v665
    %v670 = vmul.f32 %v542, %v666
    %v671 = vsub.f32 %v663, %v667
    %v672 = vsub.f32 %v664, %v668
    %v673 = vsub.f32 %v665, %v669
    %v674 = vsub.f32 %v666, %v670
    %v675 = vmax.f32 %v671, 0.0
    %v676 = vmax.f32 %v672, 0.0
    %v677 = vmax.f32 %v673, 0.0
    %v678 = vmax.f32 %v674, 0.0
    %v679 = vadd.f32 %v539, %v675
    %v680 = vadd.f32 %v540, %v676
    %v681 = vadd.f32 %v541, %v677
    %v682 = vadd.f32 %v542, %v678
    %v683 = vsel %vm111, inf, %v602
    %v684 = vsel %vm112, inf, %v601
    %v685 = vsel %vm113, inf, %v600
    %v686 = vsel %vm114, inf, %v599
    %v687 = vsel %vm115, inf, %v613
    %v688 = vsel %vm116, inf, %v612
    %v689 = vsel %vm117, inf, %v611
    %v690 = vsel %vm118, inf, %v614
    %v691 = vmin.f32 %v683, %v687
    %v692 = vmin.f32 %v684, %v688
    %v693 = vmin.f32 %v685, %v689
    %v694 = vmin.f32 %v686, %v690
    %v695 = vmin.f32 %v591, %v691
    %v696 = vmin.f32 %v592, %v692
    %v697 = vmin.f32 %v593, %v693
    %v698 = vmin.f32 %v594, %v694
    %699 = vrot.lane.b32.xlu0 %v591, 1
    %v700 = vpop.permute.xlu0 %699
    %701 = vrot.lane.b32.xlu0 %v592, 1
    %v702 = vpop.permute.xlu0 %701
    %703 = vrot.lane.b32.xlu0 %v593, 1
    %v704 = vpop.permute.xlu0 %703
    %705 = vrot.lane.b32.xlu0 %v594, 1
    %v706 = vpop.permute.xlu0 %705
    %v707 = vsel %vm119, inf, %v700
    %v708 = vsel %vm119, inf, %v702
    %v709 = vsel %vm119, inf, %v704
    %v710 = vsel %vm119, inf, %v706
    %711 = vrot.lane.b32.xlu0 %v591, 127
    %v712 = vpop.permute.xlu0 %711
    %713 = vrot.lane.b32.xlu0 %v592, 127
    %v714 = vpop.permute.xlu0 %713
    %715 = vrot.lane.b32.xlu0 %v593, 127
    %v716 = vpop.permute.xlu0 %715
    %717 = vrot.lane.b32.xlu0 %v594, 127
    %v718 = vpop.permute.xlu0 %717
    %v719 = vsel %vm120, inf, %v712
    %v720 = vsel %vm120, inf, %v714
    %v721 = vsel %vm120, inf, %v716
    %v722 = vsel %vm120, inf, %v718
    %v723 = vmin.f32 %v707, %v719
    %v724 = vmin.f32 %v708, %v720
    %v725 = vmin.f32 %v709, %v721
    %v726 = vmin.f32 %v710, %v722
    %v727 = vmin.f32 %v591, %v723
    %v728 = vmin.f32 %v592, %v724
    %v729 = vmin.f32 %v593, %v725
    %v730 = vmin.f32 %v594, %v726
    %v731 = vmin.f32 %v695, %v727
    %v732 = vmin.f32 %v696, %v728
    %v733 = vmin.f32 %v697, %v729
    %v734 = vmin.f32 %v698, %v730
    %v735 = vrot.slane %v731, 7
    %v736 = vrot.slane %v732, 7
    %v737 = vrot.slane %v733, 7
    %v738 = vrot.slane %v734, 7
    %v739 = vsel %vm125, %v737, %v738
    %v740 = vsel %vm125, %v736, %v737
    %v741 = vsel %vm125, %v735, %v736
    %v742 = vsel %vm125, %v738, %v735
    %v743 = vsel %vm111, -inf, %v742
    %v744 = vsel %vm112, -inf, %v741
    %v745 = vsel %vm113, -inf, %v740
    %v746 = vsel %vm114, -inf, %v739
    %v747 = vrot.slane %v731, 1
    %v748 = vrot.slane %v732, 1
    %v749 = vrot.slane %v733, 1
    %v750 = vrot.slane %v734, 1
    %v751 = vsel %vm138, %v749, %v750
    %v752 = vsel %vm138, %v748, %v749
    %v753 = vsel %vm138, %v747, %v748
    %v754 = vsel %vm138, %v750, %v747
    %v755 = vsel %vm115, -inf, %v753
    %v756 = vsel %vm116, -inf, %v752
    %v757 = vsel %vm117, -inf, %v751
    %v758 = vsel %vm118, -inf, %v754
    %v759 = vmax.f32 %v743, %v755
    %v760 = vmax.f32 %v744, %v756
    %v761 = vmax.f32 %v745, %v757
    %v762 = vmax.f32 %v746, %v758
    %v763 = vmax.f32 %v731, %v759
    %v764 = vmax.f32 %v732, %v760
    %v765 = vmax.f32 %v733, %v761
    %v766 = vmax.f32 %v734, %v762
    %767 = vrot.lane.b32.xlu0 %v763, 1
    %v768 = vpop.permute.xlu0 %767
    %769 = vrot.lane.b32.xlu0 %v764, 1
    %v770 = vpop.permute.xlu0 %769
    %771 = vrot.lane.b32.xlu0 %v765, 1
    %v772 = vpop.permute.xlu0 %771
    %773 = vrot.lane.b32.xlu0 %v766, 1
    %v774 = vpop.permute.xlu0 %773
    %v775 = vsel %vm119, -inf, %v768
    %v776 = vsel %vm119, -inf, %v770
    %v777 = vsel %vm119, -inf, %v772
    %v778 = vsel %vm119, -inf, %v774
    %779 = vrot.lane.b32.xlu0 %v763, 127
    %v780 = vpop.permute.xlu0 %779
    %781 = vrot.lane.b32.xlu0 %v764, 127
    %v782 = vpop.permute.xlu0 %781
    %783 = vrot.lane.b32.xlu0 %v765, 127
    %v784 = vpop.permute.xlu0 %783
    %785 = vrot.lane.b32.xlu0 %v766, 127
    %v786 = vpop.permute.xlu0 %785
    %v787 = vsel %vm120, -inf, %v780
    %v788 = vsel %vm120, -inf, %v782
    %v789 = vsel %vm120, -inf, %v784
    %v790 = vsel %vm120, -inf, %v786
    %v791 = vmax.f32 %v775, %v787
    %v792 = vmax.f32 %v776, %v788
    %v793 = vmax.f32 %v777, %v789
    %v794 = vmax.f32 %v778, %v790
    %v795 = vmax.f32 %v763, %v791
    %v796 = vmax.f32 %v764, %v792
    %v797 = vmax.f32 %v765, %v793
    %v798 = vmax.f32 %v766, %v794
    %v799 = vsub.f32 %v591, %v795
    %v800 = vsub.f32 %v592, %v796
    %v801 = vsub.f32 %v593, %v797
    %v802 = vsub.f32 %v594, %v798
    %v803 = vmax.f32 %v799, 0.0
    %v804 = vmax.f32 %v800, 0.0
    %v805 = vmax.f32 %v801, 0.0
    %v806 = vmax.f32 %v802, 0.0
    %v807 = vmul.f32 %v679, %v803
    %v808 = vmul.f32 %v680, %v804
    %v809 = vmul.f32 %v681, %v805
    %v810 = vmul.f32 %v682, %v806
    %v811 = vsub.f32 %v803, %v807
    %v812 = vsub.f32 %v804, %v808
    %v813 = vsub.f32 %v805, %v809
    %v814 = vsub.f32 %v806, %v810
    %v815 = vmax.f32 %v811, 0.0
    %v816 = vmax.f32 %v812, 0.0
    %v817 = vmax.f32 %v813, 0.0
    %v818 = vmax.f32 %v814, 0.0
    %v819 = vadd.f32 %v679, %v815
    %v820 = vadd.f32 %v680, %v816
    %v821 = vadd.f32 %v681, %v817
    %v822 = vadd.f32 %v682, %v818
    %v823 = vsel %vm111, inf, %v742
    %v824 = vsel %vm112, inf, %v741
    %v825 = vsel %vm113, inf, %v740
    %v826 = vsel %vm114, inf, %v739
    %v827 = vsel %vm115, inf, %v753
    %v828 = vsel %vm116, inf, %v752
    %v829 = vsel %vm117, inf, %v751
    %v830 = vsel %vm118, inf, %v754
    %v831 = vmin.f32 %v823, %v827
    %v832 = vmin.f32 %v824, %v828
    %v833 = vmin.f32 %v825, %v829
    %v834 = vmin.f32 %v826, %v830
    %v835 = vmin.f32 %v731, %v831
    %v836 = vmin.f32 %v732, %v832
    %v837 = vmin.f32 %v733, %v833
    %v838 = vmin.f32 %v734, %v834
    %839 = vrot.lane.b32.xlu0 %v731, 1
    %v840 = vpop.permute.xlu0 %839
    %841 = vrot.lane.b32.xlu0 %v732, 1
    %v842 = vpop.permute.xlu0 %841
    %843 = vrot.lane.b32.xlu0 %v733, 1
    %v844 = vpop.permute.xlu0 %843
    %845 = vrot.lane.b32.xlu0 %v734, 1
    %v846 = vpop.permute.xlu0 %845
    %v847 = vsel %vm119, inf, %v840
    %v848 = vsel %vm119, inf, %v842
    %v849 = vsel %vm119, inf, %v844
    %v850 = vsel %vm119, inf, %v846
    %851 = vrot.lane.b32.xlu0 %v731, 127
    %v852 = vpop.permute.xlu0 %851
    %853 = vrot.lane.b32.xlu0 %v732, 127
    %v854 = vpop.permute.xlu0 %853
    %855 = vrot.lane.b32.xlu0 %v733, 127
    %v856 = vpop.permute.xlu0 %855
    %857 = vrot.lane.b32.xlu0 %v734, 127
    %v858 = vpop.permute.xlu0 %857
    %v859 = vsel %vm120, inf, %v852
    %v860 = vsel %vm120, inf, %v854
    %v861 = vsel %vm120, inf, %v856
    %v862 = vsel %vm120, inf, %v858
    %v863 = vmin.f32 %v847, %v859
    %v864 = vmin.f32 %v848, %v860
    %v865 = vmin.f32 %v849, %v861
    %v866 = vmin.f32 %v850, %v862
    %v867 = vmin.f32 %v731, %v863
    %v868 = vmin.f32 %v732, %v864
    %v869 = vmin.f32 %v733, %v865
    %v870 = vmin.f32 %v734, %v866
    %v871 = vmin.f32 %v835, %v867
    %v872 = vmin.f32 %v836, %v868
    %v873 = vmin.f32 %v837, %v869
    %v874 = vmin.f32 %v838, %v870
    %v875 = vrot.slane %v871, 7
    %v876 = vrot.slane %v872, 7
    %v877 = vrot.slane %v873, 7
    %v878 = vrot.slane %v874, 7
    %v879 = vsel %vm125, %v877, %v878
    %v880 = vsel %vm125, %v876, %v877
    %v881 = vsel %vm125, %v875, %v876
    %v882 = vsel %vm125, %v878, %v875
    %v883 = vsel %vm111, -inf, %v882
    %v884 = vsel %vm112, -inf, %v881
    %v885 = vsel %vm113, -inf, %v880
    %v886 = vsel %vm114, -inf, %v879
    %v887 = vrot.slane %v871, 1
    %v888 = vrot.slane %v872, 1
    %v889 = vrot.slane %v873, 1
    %v890 = vrot.slane %v874, 1
    %v891 = vsel %vm138, %v889, %v890
    %v892 = vsel %vm138, %v888, %v889
    %v893 = vsel %vm138, %v887, %v888
    %v894 = vsel %vm138, %v890, %v887
    %v895 = vsel %vm115, -inf, %v893
    %v896 = vsel %vm116, -inf, %v892
    %v897 = vsel %vm117, -inf, %v891
    %v898 = vsel %vm118, -inf, %v894
    %v899 = vmax.f32 %v883, %v895
    %v900 = vmax.f32 %v884, %v896
    %v901 = vmax.f32 %v885, %v897
    %v902 = vmax.f32 %v886, %v898
    %v903 = vmax.f32 %v871, %v899
    %v904 = vmax.f32 %v872, %v900
    %v905 = vmax.f32 %v873, %v901
    %v906 = vmax.f32 %v874, %v902
    %907 = vrot.lane.b32.xlu0 %v903, 1
    %v908 = vpop.permute.xlu0 %907
    %909 = vrot.lane.b32.xlu0 %v904, 1
    %v910 = vpop.permute.xlu0 %909
    %911 = vrot.lane.b32.xlu0 %v905, 1
    %v912 = vpop.permute.xlu0 %911
    %913 = vrot.lane.b32.xlu0 %v906, 1
    %v914 = vpop.permute.xlu0 %913
    %v915 = vsel %vm119, -inf, %v908
    %v916 = vsel %vm119, -inf, %v910
    %v917 = vsel %vm119, -inf, %v912
    %v918 = vsel %vm119, -inf, %v914
    %919 = vrot.lane.b32.xlu0 %v903, 127
    %v920 = vpop.permute.xlu0 %919
    %921 = vrot.lane.b32.xlu0 %v904, 127
    %v922 = vpop.permute.xlu0 %921
    %923 = vrot.lane.b32.xlu0 %v905, 127
    %v924 = vpop.permute.xlu0 %923
    %925 = vrot.lane.b32.xlu0 %v906, 127
    %v926 = vpop.permute.xlu0 %925
    %v927 = vsel %vm120, -inf, %v920
    %v928 = vsel %vm120, -inf, %v922
    %v929 = vsel %vm120, -inf, %v924
    %v930 = vsel %vm120, -inf, %v926
    %v931 = vmax.f32 %v915, %v927
    %v932 = vmax.f32 %v916, %v928
    %v933 = vmax.f32 %v917, %v929
    %v934 = vmax.f32 %v918, %v930
    %v935 = vmax.f32 %v903, %v931
    %v936 = vmax.f32 %v904, %v932
    %v937 = vmax.f32 %v905, %v933
    %v938 = vmax.f32 %v906, %v934
    %v939 = vsub.f32 %v731, %v935
    %v940 = vsub.f32 %v732, %v936
    %v941 = vsub.f32 %v733, %v937
    %v942 = vsub.f32 %v734, %v938
    %v943 = vmax.f32 %v939, 0.0
    %v944 = vmax.f32 %v940, 0.0
    %v945 = vmax.f32 %v941, 0.0
    %v946 = vmax.f32 %v942, 0.0
    %v947 = vmul.f32 %v819, %v943
    %v948 = vmul.f32 %v820, %v944
    %v949 = vmul.f32 %v821, %v945
    %v950 = vmul.f32 %v822, %v946
    %v951 = vsub.f32 %v943, %v947
    %v952 = vsub.f32 %v944, %v948
    %v953 = vsub.f32 %v945, %v949
    %v954 = vsub.f32 %v946, %v950
    %v955 = vmax.f32 %v951, 0.0
    %v956 = vmax.f32 %v952, 0.0
    %v957 = vmax.f32 %v953, 0.0
    %v958 = vmax.f32 %v954, 0.0
    %v959 = vadd.f32 %v819, %v955
    %v960 = vadd.f32 %v820, %v956
    %v961 = vadd.f32 %v821, %v957
    %v962 = vadd.f32 %v822, %v958
    %v963 = vsel %vm111, inf, %v882
    %v964 = vsel %vm112, inf, %v881
    %v965 = vsel %vm113, inf, %v880
    %v966 = vsel %vm114, inf, %v879
    %v967 = vsel %vm115, inf, %v893
    %v968 = vsel %vm116, inf, %v892
    %v969 = vsel %vm117, inf, %v891
    %v970 = vsel %vm118, inf, %v894
    %v971 = vmin.f32 %v963, %v967
    %v972 = vmin.f32 %v964, %v968
    %v973 = vmin.f32 %v965, %v969
    %v974 = vmin.f32 %v966, %v970
    %v975 = vmin.f32 %v871, %v971
    %v976 = vmin.f32 %v872, %v972
    %v977 = vmin.f32 %v873, %v973
    %v978 = vmin.f32 %v874, %v974
    %979 = vrot.lane.b32.xlu0 %v871, 1
    %v980 = vpop.permute.xlu0 %979
    %981 = vrot.lane.b32.xlu0 %v872, 1
    %v982 = vpop.permute.xlu0 %981
    %983 = vrot.lane.b32.xlu0 %v873, 1
    %v984 = vpop.permute.xlu0 %983
    %985 = vrot.lane.b32.xlu0 %v874, 1
    %v986 = vpop.permute.xlu0 %985
    %v987 = vsel %vm119, inf, %v980
    %v988 = vsel %vm119, inf, %v982
    %v989 = vsel %vm119, inf, %v984
    %v990 = vsel %vm119, inf, %v986
    %991 = vrot.lane.b32.xlu0 %v871, 127
    %v992 = vpop.permute.xlu0 %991
    %993 = vrot.lane.b32.xlu0 %v872, 127
    %v994 = vpop.permute.xlu0 %993
    %995 = vrot.lane.b32.xlu0 %v873, 127
    %v996 = vpop.permute.xlu0 %995
    %997 = vrot.lane.b32.xlu0 %v874, 127
    %v998 = vpop.permute.xlu0 %997
    %v999 = vsel %vm120, inf, %v992
    %v1000 = vsel %vm120, inf, %v994
    %v1001 = vsel %vm120, inf, %v996
    %v1002 = vsel %vm120, inf, %v998
    %v1003 = vmin.f32 %v987, %v999
    %v1004 = vmin.f32 %v988, %v1000
    %v1005 = vmin.f32 %v989, %v1001
    %v1006 = vmin.f32 %v990, %v1002
    %v1007 = vmin.f32 %v871, %v1003
    %v1008 = vmin.f32 %v872, %v1004
    %v1009 = vmin.f32 %v873, %v1005
    %v1010 = vmin.f32 %v874, %v1006
    %v1011 = vmin.f32 %v975, %v1007
    %v1012 = vmin.f32 %v976, %v1008
    %v1013 = vmin.f32 %v977, %v1009
    %v1014 = vmin.f32 %v978, %v1010
    %v1015 = vrot.slane %v1011, 7
    %v1016 = vrot.slane %v1012, 7
    %v1017 = vrot.slane %v1013, 7
    %v1018 = vrot.slane %v1014, 7
    %v1019 = vsel %vm125, %v1017, %v1018
    %v1020 = vsel %vm125, %v1016, %v1017
    %v1021 = vsel %vm125, %v1015, %v1016
    %v1022 = vsel %vm125, %v1018, %v1015
    %v1023 = vsel %vm111, -inf, %v1022
    %v1024 = vsel %vm112, -inf, %v1021
    %v1025 = vsel %vm113, -inf, %v1020
    %v1026 = vsel %vm114, -inf, %v1019
    %v1027 = vrot.slane %v1011, 1
    %v1028 = vrot.slane %v1012, 1
    %v1029 = vrot.slane %v1013, 1
    %v1030 = vrot.slane %v1014, 1
    %v1031 = vsel %vm138, %v1029, %v1030
    %v1032 = vsel %vm138, %v1028, %v1029
    %v1033 = vsel %vm138, %v1027, %v1028
    %v1034 = vsel %vm138, %v1030, %v1027
    %v1035 = vsel %vm115, -inf, %v1033
    %v1036 = vsel %vm116, -inf, %v1032
    %v1037 = vsel %vm117, -inf, %v1031
    %v1038 = vsel %vm118, -inf, %v1034
    %v1039 = vmax.f32 %v1023, %v1035
    %v1040 = vmax.f32 %v1024, %v1036
    %v1041 = vmax.f32 %v1025, %v1037
    %v1042 = vmax.f32 %v1026, %v1038
    %v1043 = vmax.f32 %v1011, %v1039
    %v1044 = vmax.f32 %v1012, %v1040
    %v1045 = vmax.f32 %v1013, %v1041
    %v1046 = vmax.f32 %v1014, %v1042
    %1047 = vrot.lane.b32.xlu0 %v1043, 1
    %v1048 = vpop.permute.xlu0 %1047
    %1049 = vrot.lane.b32.xlu0 %v1044, 1
    %v1050 = vpop.permute.xlu0 %1049
    %1051 = vrot.lane.b32.xlu0 %v1045, 1
    %v1052 = vpop.permute.xlu0 %1051
    %1053 = vrot.lane.b32.xlu0 %v1046, 1
    %v1054 = vpop.permute.xlu0 %1053
    %v1055 = vsel %vm119, -inf, %v1048
    %v1056 = vsel %vm119, -inf, %v1050
    %v1057 = vsel %vm119, -inf, %v1052
    %v1058 = vsel %vm119, -inf, %v1054
    %1059 = vrot.lane.b32.xlu0 %v1043, 127
    %v1060 = vpop.permute.xlu0 %1059
    %1061 = vrot.lane.b32.xlu0 %v1044, 127
    %v1062 = vpop.permute.xlu0 %1061
    %1063 = vrot.lane.b32.xlu0 %v1045, 127
    %v1064 = vpop.permute.xlu0 %1063
    %1065 = vrot.lane.b32.xlu0 %v1046, 127
    %v1066 = vpop.permute.xlu0 %1065
    %v1067 = vsel %vm120, -inf, %v1060
    %v1068 = vsel %vm120, -inf, %v1062
    %v1069 = vsel %vm120, -inf, %v1064
    %v1070 = vsel %vm120, -inf, %v1066
    %v1071 = vmax.f32 %v1055, %v1067
    %v1072 = vmax.f32 %v1056, %v1068
    %v1073 = vmax.f32 %v1057, %v1069
    %v1074 = vmax.f32 %v1058, %v1070
    %v1075 = vmax.f32 %v1043, %v1071
    %v1076 = vmax.f32 %v1044, %v1072
    %v1077 = vmax.f32 %v1045, %v1073
    %v1078 = vmax.f32 %v1046, %v1074
    %v1079 = vsub.f32 %v871, %v1075
    %v1080 = vsub.f32 %v872, %v1076
    %v1081 = vsub.f32 %v873, %v1077
    %v1082 = vsub.f32 %v874, %v1078
    %v1083 = vmax.f32 %v1079, 0.0
    %v1084 = vmax.f32 %v1080, 0.0
    %v1085 = vmax.f32 %v1081, 0.0
    %v1086 = vmax.f32 %v1082, 0.0
    %v1087 = vmul.f32 %v959, %v1083
    %v1088 = vmul.f32 %v960, %v1084
    %v1089 = vmul.f32 %v961, %v1085
    %v1090 = vmul.f32 %v962, %v1086
    %v1091 = vsub.f32 %v1083, %v1087
    %v1092 = vsub.f32 %v1084, %v1088
    %v1093 = vsub.f32 %v1085, %v1089
    %v1094 = vsub.f32 %v1086, %v1090
    %v1095 = vmax.f32 %v1091, 0.0
    %v1096 = vmax.f32 %v1092, 0.0
    %v1097 = vmax.f32 %v1093, 0.0
    %v1098 = vmax.f32 %v1094, 0.0
    %v1099 = vadd.f32 %v959, %v1095
    %v1100 = vadd.f32 %v960, %v1096
    %v1101 = vadd.f32 %v961, %v1097
    %v1102 = vadd.f32 %v962, %v1098
    %v1103 = vsel %vm111, inf, %v1022
    %v1104 = vsel %vm112, inf, %v1021
    %v1105 = vsel %vm113, inf, %v1020
    %v1106 = vsel %vm114, inf, %v1019
    %v1107 = vsel %vm115, inf, %v1033
    %v1108 = vsel %vm116, inf, %v1032
    %v1109 = vsel %vm117, inf, %v1031
    %v1110 = vsel %vm118, inf, %v1034
    %v1111 = vmin.f32 %v1103, %v1107
    %v1112 = vmin.f32 %v1104, %v1108
    %v1113 = vmin.f32 %v1105, %v1109
    %v1114 = vmin.f32 %v1106, %v1110
    %v1115 = vmin.f32 %v1011, %v1111
    %v1116 = vmin.f32 %v1012, %v1112
    %v1117 = vmin.f32 %v1013, %v1113
    %v1118 = vmin.f32 %v1014, %v1114
    %1119 = vrot.lane.b32.xlu0 %v1011, 1
    %v1120 = vpop.permute.xlu0 %1119
    %1121 = vrot.lane.b32.xlu0 %v1012, 1
    %v1122 = vpop.permute.xlu0 %1121
    %1123 = vrot.lane.b32.xlu0 %v1013, 1
    %v1124 = vpop.permute.xlu0 %1123
    %1125 = vrot.lane.b32.xlu0 %v1014, 1
    %v1126 = vpop.permute.xlu0 %1125
    %v1127 = vsel %vm119, inf, %v1120
    %v1128 = vsel %vm119, inf, %v1122
    %v1129 = vsel %vm119, inf, %v1124
    %v1130 = vsel %vm119, inf, %v1126
    %1131 = vrot.lane.b32.xlu0 %v1011, 127
    %v1132 = vpop.permute.xlu0 %1131
    %1133 = vrot.lane.b32.xlu0 %v1012, 127
    %v1134 = vpop.permute.xlu0 %1133
    %1135 = vrot.lane.b32.xlu0 %v1013, 127
    %v1136 = vpop.permute.xlu0 %1135
    %1137 = vrot.lane.b32.xlu0 %v1014, 127
    %v1138 = vpop.permute.xlu0 %1137
    %v1139 = vsel %vm120, inf, %v1132
    %v1140 = vsel %vm120, inf, %v1134
    %v1141 = vsel %vm120, inf, %v1136
    %v1142 = vsel %vm120, inf, %v1138
    %v1143 = vmin.f32 %v1127, %v1139
    %v1144 = vmin.f32 %v1128, %v1140
    %v1145 = vmin.f32 %v1129, %v1141
    %v1146 = vmin.f32 %v1130, %v1142
    %v1147 = vmin.f32 %v1011, %v1143
    %v1148 = vmin.f32 %v1012, %v1144
    %v1149 = vmin.f32 %v1013, %v1145
    %v1150 = vmin.f32 %v1014, %v1146
    %v1151 = vmin.f32 %v1115, %v1147
    %v1152 = vmin.f32 %v1116, %v1148
    %v1153 = vmin.f32 %v1117, %v1149
    %v1154 = vmin.f32 %v1118, %v1150
    %v1155 = vrot.slane %v1151, 7
    %v1156 = vrot.slane %v1152, 7
    %v1157 = vrot.slane %v1153, 7
    %v1158 = vrot.slane %v1154, 7
    %v1159 = vsel %vm125, %v1157, %v1158
    %v1160 = vsel %vm125, %v1156, %v1157
    %v1161 = vsel %vm125, %v1155, %v1156
    %v1162 = vsel %vm125, %v1158, %v1155
    %v1163 = vsel %vm111, -inf, %v1162
    %v1164 = vsel %vm112, -inf, %v1161
    %v1165 = vsel %vm113, -inf, %v1160
    %v1166 = vsel %vm114, -inf, %v1159
    %v1167 = vrot.slane %v1151, 1
    %v1168 = vrot.slane %v1152, 1
    %v1169 = vrot.slane %v1153, 1
    %v1170 = vrot.slane %v1154, 1
    %v1171 = vsel %vm138, %v1169, %v1170
    %v1172 = vsel %vm138, %v1168, %v1169
    %v1173 = vsel %vm138, %v1167, %v1168
    %v1174 = vsel %vm138, %v1170, %v1167
    %v1175 = vsel %vm115, -inf, %v1173
    %v1176 = vsel %vm116, -inf, %v1172
    %v1177 = vsel %vm117, -inf, %v1171
    %v1178 = vsel %vm118, -inf, %v1174
    %v1179 = vmax.f32 %v1163, %v1175
    %v1180 = vmax.f32 %v1164, %v1176
    %v1181 = vmax.f32 %v1165, %v1177
    %v1182 = vmax.f32 %v1166, %v1178
    %v1183 = vmax.f32 %v1151, %v1179
    %v1184 = vmax.f32 %v1152, %v1180
    %v1185 = vmax.f32 %v1153, %v1181
    %v1186 = vmax.f32 %v1154, %v1182
    %1187 = vrot.lane.b32.xlu0 %v1183, 1
    %v1188 = vpop.permute.xlu0 %1187
    %1189 = vrot.lane.b32.xlu0 %v1184, 1
    %v1190 = vpop.permute.xlu0 %1189
    %1191 = vrot.lane.b32.xlu0 %v1185, 1
    %v1192 = vpop.permute.xlu0 %1191
    %1193 = vrot.lane.b32.xlu0 %v1186, 1
    %v1194 = vpop.permute.xlu0 %1193
    %v1195 = vsel %vm119, -inf, %v1188
    %v1196 = vsel %vm119, -inf, %v1190
    %v1197 = vsel %vm119, -inf, %v1192
    %v1198 = vsel %vm119, -inf, %v1194
    %1199 = vrot.lane.b32.xlu0 %v1183, 127
    %v1200 = vpop.permute.xlu0 %1199
    %1201 = vrot.lane.b32.xlu0 %v1184, 127
    %v1202 = vpop.permute.xlu0 %1201
    %1203 = vrot.lane.b32.xlu0 %v1185, 127
    %v1204 = vpop.permute.xlu0 %1203
    %1205 = vrot.lane.b32.xlu0 %v1186, 127
    %v1206 = vpop.permute.xlu0 %1205
    %v1207 = vsel %vm120, -inf, %v1200
    %v1208 = vsel %vm120, -inf, %v1202
    %v1209 = vsel %vm120, -inf, %v1204
    %v1210 = vsel %vm120, -inf, %v1206
    %v1211 = vmax.f32 %v1195, %v1207
    %v1212 = vmax.f32 %v1196, %v1208
    %v1213 = vmax.f32 %v1197, %v1209
    %v1214 = vmax.f32 %v1198, %v1210
    %v1215 = vmax.f32 %v1183, %v1211
    %v1216 = vmax.f32 %v1184, %v1212
    %v1217 = vmax.f32 %v1185, %v1213
    %v1218 = vmax.f32 %v1186, %v1214
    %v1219 = vsub.f32 %v1011, %v1215
    %v1220 = vsub.f32 %v1012, %v1216
    %v1221 = vsub.f32 %v1013, %v1217
    %v1222 = vsub.f32 %v1014, %v1218
    %v1223 = vmax.f32 %v1219, 0.0
    %v1224 = vmax.f32 %v1220, 0.0
    %v1225 = vmax.f32 %v1221, 0.0
    %v1226 = vmax.f32 %v1222, 0.0
    %v1227 = vmul.f32 %v1099, %v1223
    %v1228 = vmul.f32 %v1100, %v1224
    %v1229 = vmul.f32 %v1101, %v1225
    %v1230 = vmul.f32 %v1102, %v1226
    %v1231 = vsub.f32 %v1223, %v1227
    %v1232 = vsub.f32 %v1224, %v1228
    %v1233 = vsub.f32 %v1225, %v1229
    %v1234 = vsub.f32 %v1226, %v1230
    %v1235 = vmax.f32 %v1231, 0.0
    %v1236 = vmax.f32 %v1232, 0.0
    %v1237 = vmax.f32 %v1233, 0.0
    %v1238 = vmax.f32 %v1234, 0.0
    %v1239 = vadd.f32 %v1099, %v1235
    %v1240 = vadd.f32 %v1100, %v1236
    %v1241 = vadd.f32 %v1101, %v1237
    %v1242 = vadd.f32 %v1102, %v1238
    %v1243 = vsel %vm111, inf, %v1162
    %v1244 = vsel %vm112, inf, %v1161
    %v1245 = vsel %vm113, inf, %v1160
    %v1246 = vsel %vm114, inf, %v1159
    %v1247 = vsel %vm115, inf, %v1173
    %v1248 = vsel %vm116, inf, %v1172
    %v1249 = vsel %vm117, inf, %v1171
    %v1250 = vsel %vm118, inf, %v1174
    %v1251 = vmin.f32 %v1243, %v1247
    %v1252 = vmin.f32 %v1244, %v1248
    %v1253 = vmin.f32 %v1245, %v1249
    %v1254 = vmin.f32 %v1246, %v1250
    %v1255 = vmin.f32 %v1151, %v1251
    %v1256 = vmin.f32 %v1152, %v1252
    %v1257 = vmin.f32 %v1153, %v1253
    %v1258 = vmin.f32 %v1154, %v1254
    %1259 = vrot.lane.b32.xlu0 %v1151, 1
    %v1260 = vpop.permute.xlu0 %1259
    %1261 = vrot.lane.b32.xlu0 %v1152, 1
    %v1262 = vpop.permute.xlu0 %1261
    %1263 = vrot.lane.b32.xlu0 %v1153, 1
    %v1264 = vpop.permute.xlu0 %1263
    %1265 = vrot.lane.b32.xlu0 %v1154, 1
    %v1266 = vpop.permute.xlu0 %1265
    %v1267 = vsel %vm119, inf, %v1260
    %v1268 = vsel %vm119, inf, %v1262
    %v1269 = vsel %vm119, inf, %v1264
    %v1270 = vsel %vm119, inf, %v1266
    %1271 = vrot.lane.b32.xlu0 %v1151, 127
    %v1272 = vpop.permute.xlu0 %1271
    %1273 = vrot.lane.b32.xlu0 %v1152, 127
    %v1274 = vpop.permute.xlu0 %1273
    %1275 = vrot.lane.b32.xlu0 %v1153, 127
    %v1276 = vpop.permute.xlu0 %1275
    %1277 = vrot.lane.b32.xlu0 %v1154, 127
    %v1278 = vpop.permute.xlu0 %1277
    %v1279 = vsel %vm120, inf, %v1272
    %v1280 = vsel %vm120, inf, %v1274
    %v1281 = vsel %vm120, inf, %v1276
    %v1282 = vsel %vm120, inf, %v1278
    %v1283 = vmin.f32 %v1267, %v1279
    %v1284 = vmin.f32 %v1268, %v1280
    %v1285 = vmin.f32 %v1269, %v1281
    %v1286 = vmin.f32 %v1270, %v1282
    %v1287 = vmin.f32 %v1151, %v1283
    %v1288 = vmin.f32 %v1152, %v1284
    %v1289 = vmin.f32 %v1153, %v1285
    %v1290 = vmin.f32 %v1154, %v1286
    %v1291 = vmin.f32 %v1255, %v1287
    %v1292 = vmin.f32 %v1256, %v1288
    %v1293 = vmin.f32 %v1257, %v1289
    %v1294 = vmin.f32 %v1258, %v1290
    %v1295 = vrot.slane %v1291, 7
    %v1296 = vrot.slane %v1292, 7
    %v1297 = vrot.slane %v1293, 7
    %v1298 = vrot.slane %v1294, 7
    %v1299 = vsel %vm125, %v1297, %v1298
    %v1300 = vsel %vm125, %v1296, %v1297
    %v1301 = vsel %vm125, %v1295, %v1296
    %v1302 = vsel %vm125, %v1298, %v1295
    %v1303 = vsel %vm111, -inf, %v1302
    %v1304 = vsel %vm112, -inf, %v1301
    %v1305 = vsel %vm113, -inf, %v1300
    %v1306 = vsel %vm114, -inf, %v1299
    %v1307 = vrot.slane %v1291, 1
    %v1308 = vrot.slane %v1292, 1
    %v1309 = vrot.slane %v1293, 1
    %v1310 = vrot.slane %v1294, 1
    %v1311 = vsel %vm138, %v1309, %v1310
    %v1312 = vsel %vm138, %v1308, %v1309
    %v1313 = vsel %vm138, %v1307, %v1308
    %v1314 = vsel %vm138, %v1310, %v1307
    %v1315 = vsel %vm115, -inf, %v1313
    %v1316 = vsel %vm116, -inf, %v1312
    %v1317 = vsel %vm117, -inf, %v1311
    %v1318 = vsel %vm118, -inf, %v1314
    %v1319 = vmax.f32 %v1303, %v1315
    %v1320 = vmax.f32 %v1304, %v1316
    %v1321 = vmax.f32 %v1305, %v1317
    %v1322 = vmax.f32 %v1306, %v1318
    %v1323 = vmax.f32 %v1291, %v1319
    %v1324 = vmax.f32 %v1292, %v1320
    %v1325 = vmax.f32 %v1293, %v1321
    %v1326 = vmax.f32 %v1294, %v1322
    %1327 = vrot.lane.b32.xlu0 %v1323, 1
    %v1328 = vpop.permute.xlu0 %1327
    %1329 = vrot.lane.b32.xlu0 %v1324, 1
    %v1330 = vpop.permute.xlu0 %1329
    %1331 = vrot.lane.b32.xlu0 %v1325, 1
    %v1332 = vpop.permute.xlu0 %1331
    %1333 = vrot.lane.b32.xlu0 %v1326, 1
    %v1334 = vpop.permute.xlu0 %1333
    %v1335 = vsel %vm119, -inf, %v1328
    %v1336 = vsel %vm119, -inf, %v1330
    %v1337 = vsel %vm119, -inf, %v1332
    %v1338 = vsel %vm119, -inf, %v1334
    %1339 = vrot.lane.b32.xlu0 %v1323, 127
    %v1340 = vpop.permute.xlu0 %1339
    %1341 = vrot.lane.b32.xlu0 %v1324, 127
    %v1342 = vpop.permute.xlu0 %1341
    %1343 = vrot.lane.b32.xlu0 %v1325, 127
    %v1344 = vpop.permute.xlu0 %1343
    %1345 = vrot.lane.b32.xlu0 %v1326, 127
    %v1346 = vpop.permute.xlu0 %1345
    %v1347 = vsel %vm120, -inf, %v1340
    %v1348 = vsel %vm120, -inf, %v1342
    %v1349 = vsel %vm120, -inf, %v1344
    %v1350 = vsel %vm120, -inf, %v1346
    %v1351 = vmax.f32 %v1335, %v1347
    %v1352 = vmax.f32 %v1336, %v1348
    %v1353 = vmax.f32 %v1337, %v1349
    %v1354 = vmax.f32 %v1338, %v1350
    %v1355 = vmax.f32 %v1323, %v1351
    %v1356 = vmax.f32 %v1324, %v1352
    %v1357 = vmax.f32 %v1325, %v1353
    %v1358 = vmax.f32 %v1326, %v1354
    %v1359 = vsub.f32 %v1151, %v1355
    %v1360 = vsub.f32 %v1152, %v1356
    %v1361 = vsub.f32 %v1153, %v1357
    %v1362 = vsub.f32 %v1154, %v1358
    %v1363 = vmax.f32 %v1359, 0.0
    %v1364 = vmax.f32 %v1360, 0.0
    %v1365 = vmax.f32 %v1361, 0.0
    %v1366 = vmax.f32 %v1362, 0.0
    %v1367 = vmul.f32 %v1239, %v1363
    %v1368 = vmul.f32 %v1240, %v1364
    %v1369 = vmul.f32 %v1241, %v1365
    %v1370 = vmul.f32 %v1242, %v1366
    %v1371 = vsub.f32 %v1363, %v1367
    %v1372 = vsub.f32 %v1364, %v1368
    %v1373 = vsub.f32 %v1365, %v1369
    %v1374 = vsub.f32 %v1366, %v1370
    %v1375 = vmax.f32 %v1371, 0.0
    %v1376 = vmax.f32 %v1372, 0.0
    %v1377 = vmax.f32 %v1373, 0.0
    %v1378 = vmax.f32 %v1374, 0.0
    %v1379 = vadd.f32 %v1239, %v1375
    %v1380 = vadd.f32 %v1240, %v1376
    %v1381 = vadd.f32 %v1241, %v1377
    %v1382 = vadd.f32 %v1242, %v1378
    %v1383 = vsel %vm111, inf, %v1302
    %v1384 = vsel %vm112, inf, %v1301
    %v1385 = vsel %vm113, inf, %v1300
    %v1386 = vsel %vm114, inf, %v1299
    %v1387 = vsel %vm115, inf, %v1313
    %v1388 = vsel %vm116, inf, %v1312
    %v1389 = vsel %vm117, inf, %v1311
    %v1390 = vsel %vm118, inf, %v1314
    %v1391 = vmin.f32 %v1383, %v1387
    %v1392 = vmin.f32 %v1384, %v1388
    %v1393 = vmin.f32 %v1385, %v1389
    %v1394 = vmin.f32 %v1386, %v1390
    %v1395 = vmin.f32 %v1291, %v1391
    %v1396 = vmin.f32 %v1292, %v1392
    %v1397 = vmin.f32 %v1293, %v1393
    %v1398 = vmin.f32 %v1294, %v1394
    %1399 = vrot.lane.b32.xlu0 %v1291, 1
    %v1400 = vpop.permute.xlu0 %1399
    %1401 = vrot.lane.b32.xlu0 %v1292, 1
    %v1402 = vpop.permute.xlu0 %1401
    %1403 = vrot.lane.b32.xlu0 %v1293, 1
    %v1404 = vpop.permute.xlu0 %1403
    %1405 = vrot.lane.b32.xlu0 %v1294, 1
    %v1406 = vpop.permute.xlu0 %1405
    %v1407 = vsel %vm119, inf, %v1400
    %v1408 = vsel %vm119, inf, %v1402
    %v1409 = vsel %vm119, inf, %v1404
    %v1410 = vsel %vm119, inf, %v1406
    %1411 = vrot.lane.b32.xlu0 %v1291, 127
    %v1412 = vpop.permute.xlu0 %1411
    %1413 = vrot.lane.b32.xlu0 %v1292, 127
    %v1414 = vpop.permute.xlu0 %1413
    %1415 = vrot.lane.b32.xlu0 %v1293, 127
    %v1416 = vpop.permute.xlu0 %1415
    %1417 = vrot.lane.b32.xlu0 %v1294, 127
    %v1418 = vpop.permute.xlu0 %1417
    %v1419 = vsel %vm120, inf, %v1412
    %v1420 = vsel %vm120, inf, %v1414
    %v1421 = vsel %vm120, inf, %v1416
    %v1422 = vsel %vm120, inf, %v1418
    %v1423 = vmin.f32 %v1407, %v1419
    %v1424 = vmin.f32 %v1408, %v1420
    %v1425 = vmin.f32 %v1409, %v1421
    %v1426 = vmin.f32 %v1410, %v1422
    %v1427 = vmin.f32 %v1291, %v1423
    %v1428 = vmin.f32 %v1292, %v1424
    %v1429 = vmin.f32 %v1293, %v1425
    %v1430 = vmin.f32 %v1294, %v1426
    %v1431 = vmin.f32 %v1395, %v1427
    %v1432 = vmin.f32 %v1396, %v1428
    %v1433 = vmin.f32 %v1397, %v1429
    %v1434 = vmin.f32 %v1398, %v1430
    %v1435 = vrot.slane %v1431, 7
    %v1436 = vrot.slane %v1432, 7
    %v1437 = vrot.slane %v1433, 7
    %v1438 = vrot.slane %v1434, 7
    %v1439 = vsel %vm125, %v1437, %v1438
    %v1440 = vsel %vm125, %v1436, %v1437
    %v1441 = vsel %vm125, %v1435, %v1436
    %v1442 = vsel %vm125, %v1438, %v1435
    %v1443 = vsel %vm111, -inf, %v1442
    %v1444 = vsel %vm112, -inf, %v1441
    %v1445 = vsel %vm113, -inf, %v1440
    %v1446 = vsel %vm114, -inf, %v1439
    %v1447 = vrot.slane %v1431, 1
    %v1448 = vrot.slane %v1432, 1
    %v1449 = vrot.slane %v1433, 1
    %v1450 = vrot.slane %v1434, 1
    %v1451 = vsel %vm138, %v1449, %v1450
    %v1452 = vsel %vm138, %v1448, %v1449
    %v1453 = vsel %vm138, %v1447, %v1448
    %v1454 = vsel %vm138, %v1450, %v1447
    %v1455 = vsel %vm115, -inf, %v1453
    %v1456 = vsel %vm116, -inf, %v1452
    %v1457 = vsel %vm117, -inf, %v1451
    %v1458 = vsel %vm118, -inf, %v1454
    %v1459 = vmax.f32 %v1443, %v1455
    %v1460 = vmax.f32 %v1444, %v1456
    %v1461 = vmax.f32 %v1445, %v1457
    %v1462 = vmax.f32 %v1446, %v1458
    %v1463 = vmax.f32 %v1431, %v1459
    %v1464 = vmax.f32 %v1432, %v1460
    %v1465 = vmax.f32 %v1433, %v1461
    %v1466 = vmax.f32 %v1434, %v1462
    %1467 = vrot.lane.b32.xlu0 %v1463, 1
    %v1468 = vpop.permute.xlu0 %1467
    %1469 = vrot.lane.b32.xlu0 %v1464, 1
    %v1470 = vpop.permute.xlu0 %1469
    %1471 = vrot.lane.b32.xlu0 %v1465, 1
    %v1472 = vpop.permute.xlu0 %1471
    %1473 = vrot.lane.b32.xlu0 %v1466, 1
    %v1474 = vpop.permute.xlu0 %1473
    %v1475 = vsel %vm119, -inf, %v1468
    %v1476 = vsel %vm119, -inf, %v1470
    %v1477 = vsel %vm119, -inf, %v1472
    %v1478 = vsel %vm119, -inf, %v1474
    %1479 = vrot.lane.b32.xlu0 %v1463, 127
    %v1480 = vpop.permute.xlu0 %1479
    %1481 = vrot.lane.b32.xlu0 %v1464, 127
    %v1482 = vpop.permute.xlu0 %1481
    %1483 = vrot.lane.b32.xlu0 %v1465, 127
    %v1484 = vpop.permute.xlu0 %1483
    %1485 = vrot.lane.b32.xlu0 %v1466, 127
    %v1486 = vpop.permute.xlu0 %1485
    %v1487 = vsel %vm120, -inf, %v1480
    %v1488 = vsel %vm120, -inf, %v1482
    %v1489 = vsel %vm120, -inf, %v1484
    %v1490 = vsel %vm120, -inf, %v1486
    %v1491 = vmax.f32 %v1475, %v1487
    %v1492 = vmax.f32 %v1476, %v1488
    %v1493 = vmax.f32 %v1477, %v1489
    %v1494 = vmax.f32 %v1478, %v1490
    %v1495 = vmax.f32 %v1463, %v1491
    %v1496 = vmax.f32 %v1464, %v1492
    %v1497 = vmax.f32 %v1465, %v1493
    %v1498 = vmax.f32 %v1466, %v1494
    %v1499 = vsub.f32 %v1291, %v1495
    %v1500 = vsub.f32 %v1292, %v1496
    %v1501 = vsub.f32 %v1293, %v1497
    %v1502 = vsub.f32 %v1294, %v1498
    %v1503 = vmax.f32 %v1499, 0.0
    %v1504 = vmax.f32 %v1500, 0.0
    %v1505 = vmax.f32 %v1501, 0.0
    %v1506 = vmax.f32 %v1502, 0.0
    %v1507 = vmul.f32 %v1379, %v1503
    %v1508 = vmul.f32 %v1380, %v1504
    %v1509 = vmul.f32 %v1381, %v1505
    %v1510 = vmul.f32 %v1382, %v1506
    %v1511 = vsub.f32 %v1503, %v1507
    %v1512 = vsub.f32 %v1504, %v1508
    %v1513 = vsub.f32 %v1505, %v1509
    %v1514 = vsub.f32 %v1506, %v1510
    %v1515 = vmax.f32 %v1511, 0.0
    %v1516 = vmax.f32 %v1512, 0.0
    %v1517 = vmax.f32 %v1513, 0.0
    %v1518 = vmax.f32 %v1514, 0.0
    %v1519 = vadd.f32 %v1379, %v1515
    %v1520 = vadd.f32 %v1380, %v1516
    %v1521 = vadd.f32 %v1381, %v1517
    %v1522 = vadd.f32 %v1382, %v1518
    %v1523 = vsel %vm111, inf, %v1442
    %v1524 = vsel %vm112, inf, %v1441
    %v1525 = vsel %vm113, inf, %v1440
    %v1526 = vsel %vm114, inf, %v1439
    %v1527 = vsel %vm115, inf, %v1453
    %v1528 = vsel %vm116, inf, %v1452
    %v1529 = vsel %vm117, inf, %v1451
    %v1530 = vsel %vm118, inf, %v1454
    %v1531 = vmin.f32 %v1523, %v1527
    %v1532 = vmin.f32 %v1524, %v1528
    %v1533 = vmin.f32 %v1525, %v1529
    %v1534 = vmin.f32 %v1526, %v1530
    %v1535 = vmin.f32 %v1431, %v1531
    %v1536 = vmin.f32 %v1432, %v1532
    %v1537 = vmin.f32 %v1433, %v1533
    %v1538 = vmin.f32 %v1434, %v1534
    %1539 = vrot.lane.b32.xlu0 %v1431, 1
    %v1540 = vpop.permute.xlu0 %1539
    %1541 = vrot.lane.b32.xlu0 %v1432, 1
    %v1542 = vpop.permute.xlu0 %1541
    %1543 = vrot.lane.b32.xlu0 %v1433, 1
    %v1544 = vpop.permute.xlu0 %1543
    %1545 = vrot.lane.b32.xlu0 %v1434, 1
    %v1546 = vpop.permute.xlu0 %1545
    %v1547 = vsel %vm119, inf, %v1540
    %v1548 = vsel %vm119, inf, %v1542
    %v1549 = vsel %vm119, inf, %v1544
    %v1550 = vsel %vm119, inf, %v1546
    %1551 = vrot.lane.b32.xlu0 %v1431, 127
    %v1552 = vpop.permute.xlu0 %1551
    %1553 = vrot.lane.b32.xlu0 %v1432, 127
    %v1554 = vpop.permute.xlu0 %1553
    %1555 = vrot.lane.b32.xlu0 %v1433, 127
    %v1556 = vpop.permute.xlu0 %1555
    %1557 = vrot.lane.b32.xlu0 %v1434, 127
    %v1558 = vpop.permute.xlu0 %1557
    %v1559 = vsel %vm120, inf, %v1552
    %v1560 = vsel %vm120, inf, %v1554
    %v1561 = vsel %vm120, inf, %v1556
    %v1562 = vsel %vm120, inf, %v1558
    %v1563 = vmin.f32 %v1547, %v1559
    %v1564 = vmin.f32 %v1548, %v1560
    %v1565 = vmin.f32 %v1549, %v1561
    %v1566 = vmin.f32 %v1550, %v1562
    %v1567 = vmin.f32 %v1431, %v1563
    %v1568 = vmin.f32 %v1432, %v1564
    %v1569 = vmin.f32 %v1433, %v1565
    %v1570 = vmin.f32 %v1434, %v1566
    %v1571 = vmin.f32 %v1535, %v1567
    %v1572 = vmin.f32 %v1536, %v1568
    %v1573 = vmin.f32 %v1537, %v1569
    %v1574 = vmin.f32 %v1538, %v1570
    %v1575 = vrot.slane %v1571, 7
    %v1576 = vrot.slane %v1572, 7
    %v1577 = vrot.slane %v1573, 7
    %v1578 = vrot.slane %v1574, 7
    %v1579 = vsel %vm125, %v1577, %v1578
    %v1580 = vsel %vm125, %v1576, %v1577
    %v1581 = vsel %vm125, %v1575, %v1576
    %v1582 = vsel %vm125, %v1578, %v1575
    %v1583 = vsel %vm111, -inf, %v1582
    %v1584 = vsel %vm112, -inf, %v1581
    %v1585 = vsel %vm113, -inf, %v1580
    %v1586 = vsel %vm114, -inf, %v1579
    %v1587 = vrot.slane %v1571, 1
    %v1588 = vrot.slane %v1572, 1
    %v1589 = vrot.slane %v1573, 1
    %v1590 = vrot.slane %v1574, 1
    %v1591 = vsel %vm138, %v1589, %v1590
    %v1592 = vsel %vm138, %v1588, %v1589
    %v1593 = vsel %vm138, %v1587, %v1588
    %v1594 = vsel %vm138, %v1590, %v1587
    %v1595 = vsel %vm115, -inf, %v1593
    %v1596 = vsel %vm116, -inf, %v1592
    %v1597 = vsel %vm117, -inf, %v1591
    %v1598 = vsel %vm118, -inf, %v1594
    %v1599 = vmax.f32 %v1583, %v1595
    %v1600 = vmax.f32 %v1584, %v1596
    %v1601 = vmax.f32 %v1585, %v1597
    %v1602 = vmax.f32 %v1586, %v1598
    %v1603 = vmax.f32 %v1571, %v1599
    %v1604 = vmax.f32 %v1572, %v1600
    %v1605 = vmax.f32 %v1573, %v1601
    %v1606 = vmax.f32 %v1574, %v1602
    %1607 = vrot.lane.b32.xlu0 %v1603, 1
    %v1608 = vpop.permute.xlu0 %1607
    %1609 = vrot.lane.b32.xlu0 %v1604, 1
    %v1610 = vpop.permute.xlu0 %1609
    %1611 = vrot.lane.b32.xlu0 %v1605, 1
    %v1612 = vpop.permute.xlu0 %1611
    %1613 = vrot.lane.b32.xlu0 %v1606, 1
    %v1614 = vpop.permute.xlu0 %1613
    %v1615 = vsel %vm119, -inf, %v1608
    %v1616 = vsel %vm119, -inf, %v1610
    %v1617 = vsel %vm119, -inf, %v1612
    %v1618 = vsel %vm119, -inf, %v1614
    %1619 = vrot.lane.b32.xlu0 %v1603, 127
    %v1620 = vpop.permute.xlu0 %1619
    %1621 = vrot.lane.b32.xlu0 %v1604, 127
    %v1622 = vpop.permute.xlu0 %1621
    %1623 = vrot.lane.b32.xlu0 %v1605, 127
    %v1624 = vpop.permute.xlu0 %1623
    %1625 = vrot.lane.b32.xlu0 %v1606, 127
    %v1626 = vpop.permute.xlu0 %1625
    %v1627 = vsel %vm120, -inf, %v1620
    %v1628 = vsel %vm120, -inf, %v1622
    %v1629 = vsel %vm120, -inf, %v1624
    %v1630 = vsel %vm120, -inf, %v1626
    %v1631 = vmax.f32 %v1615, %v1627
    %v1632 = vmax.f32 %v1616, %v1628
    %v1633 = vmax.f32 %v1617, %v1629
    %v1634 = vmax.f32 %v1618, %v1630
    %v1635 = vmax.f32 %v1603, %v1631
    %v1636 = vmax.f32 %v1604, %v1632
    %v1637 = vmax.f32 %v1605, %v1633
    %v1638 = vmax.f32 %v1606, %v1634
    %v1639 = vsub.f32 %v1431, %v1635
    %v1640 = vsub.f32 %v1432, %v1636
    %v1641 = vsub.f32 %v1433, %v1637
    %v1642 = vsub.f32 %v1434, %v1638
    %v1643 = vmax.f32 %v1639, 0.0
    %v1644 = vmax.f32 %v1640, 0.0
    %v1645 = vmax.f32 %v1641, 0.0
    %v1646 = vmax.f32 %v1642, 0.0
    %v1647 = vmul.f32 %v1519, %v1643
    %v1648 = vmul.f32 %v1520, %v1644
    %v1649 = vmul.f32 %v1521, %v1645
    %v1650 = vmul.f32 %v1522, %v1646
    %v1651 = vsub.f32 %v1643, %v1647
    %v1652 = vsub.f32 %v1644, %v1648
    %v1653 = vsub.f32 %v1645, %v1649
    %v1654 = vsub.f32 %v1646, %v1650
    %v1655 = vmax.f32 %v1651, 0.0
    %v1656 = vmax.f32 %v1652, 0.0
    %v1657 = vmax.f32 %v1653, 0.0
    %v1658 = vmax.f32 %v1654, 0.0
    %v1659 = vadd.f32 %v1519, %v1655
    %v1660 = vadd.f32 %v1520, %v1656
    %v1661 = vadd.f32 %v1521, %v1657
    %v1662 = vadd.f32 %v1522, %v1658
    %v1663 = vmul.f32 %v40, %v42
    %v1664 = vmul.f32 %v41, %v43
    %v1665 = vadd.f32 %v1663, %v1664
    %v1666 = vrot.slane %v1665, 4
    %v1667 = vadd.f32 %v1665, %v1666
    %v1668 = vrot.slane %v1667, 2
    %v1669 = vadd.f32 %v1667, %v1668
    %v1670 = vrot.slane %v1669, 1
    %v1671 = vadd.f32 %v1669, %v1670
    %v1672 = vadd.f32 %v40, %v41
    %v1673 = vrot.slane %v1672, 4
    %v1674 = vadd.f32 %v1672, %v1673
    %v1675 = vrot.slane %v1674, 2
    %v1676 = vadd.f32 %v1674, %v1675
    %v1677 = vrot.slane %v1676, 1
    %v1678 = vadd.f32 %v1676, %v1677
    %v1679 = vadd.f32 %v42, %v43
    %v1680 = vrot.slane %v1679, 4
    %v1681 = vadd.f32 %v1679, %v1680
    %v1682 = vrot.slane %v1681, 2
    %v1683 = vadd.f32 %v1681, %v1682
    %v1684 = vrot.slane %v1683, 1
    %v1685 = vadd.f32 %v1683, %v1684
    %v1686 = vmul.f32 %v1661, %v40
    %v1687 = vmul.f32 %v1662, %v41
    %v1688 = vadd.f32 %v1686, %v1687
    %v1689 = vrot.slane %v1688, 4
    %v1690 = vadd.f32 %v1688, %v1689
    %v1691 = vrot.slane %v1690, 2
    %v1692 = vadd.f32 %v1690, %v1691
    %v1693 = vrot.slane %v1692, 1
    %v1694 = vadd.f32 %v1692, %v1693
    %v1695 = vadd.f32 %v1661, %v1662
    %v1696 = vrot.slane %v1695, 4
    %v1697 = vadd.f32 %v1695, %v1696
    %v1698 = vrot.slane %v1697, 2
    %v1699 = vadd.f32 %v1697, %v1698
    %v1700 = vrot.slane %v1699, 1
    %v1701 = vadd.f32 %v1699, %v1700
    %v1702 = vmul.f32 %v1659, %v42
    %v1703 = vmul.f32 %v1660, %v43
    %v1704 = vadd.f32 %v1702, %v1703
    %v1705 = vrot.slane %v1704, 4
    %v1706 = vadd.f32 %v1704, %v1705
    %v1707 = vrot.slane %v1706, 2
    %v1708 = vadd.f32 %v1706, %v1707
    %v1709 = vrot.slane %v1708, 1
    %v1710 = vadd.f32 %v1708, %v1709
    %v1711 = vadd.f32 %v1659, %v1660
    %v1712 = vrot.slane %v1711, 4
    %v1713 = vadd.f32 %v1711, %v1712
    %v1714 = vrot.slane %v1713, 2
    %v1715 = vadd.f32 %v1713, %v1714
    %v1716 = vrot.slane %v1715, 1
    %v1717 = vadd.f32 %v1715, %v1716
    %vm1718 = vcmask 1040384
    %v1719 = vsel %vm1718, %v1671, %v1678
    %vm1720 = vcmask 1041408
    %v1721 = vsel %vm1720, %v1719, %v1685
    %vm1722 = vcmask 1042432
    %v1723 = vsel %vm1722, %v1721, %v1694
    %vm1724 = vcmask 1043456
    %v1725 = vsel %vm1724, %v1723, %v1701
    %vm1726 = vcmask 1044480
    %v1727 = vsel %vm1726, %v1725, %v1710
    %vm1728 = vcmask 1045504
    %v1729 = vsel %vm1728, %v1727, %v1717
    %vm1730 = vcmask 1046528
    %v1731 = vsel %vm1730, %v1729, 0.0
    %1732 = vst [vmem:[#allocation7] sm:$0xff] %v1731
    // Predicated region
    $region18: #{tpu_custom_call.1} parent=1 // pred_check
      _
    $region19: #{tpu_custom_call.1} parent=1 // pred_check_branch
      %1734 = sbr.rel (0) target = $region21
    $region20: #{tpu_custom_call.1} parent=1 // pred_region
      %s1736 = ssub.s32 128, 128
      %1737 = vsyncadd [#allocation4], %s1736
      %s1739 = sshll.u32 [#allocation7], 4
      %s1740 = int_to_ptr.vmem [resolvable:$true] %s1739
      %1742 = dma.vmem_to_hbm [thread:$0]  %s1740, 128, %s2, [#allocation4]
    $region21: #{tpu_custom_call.1} parent=1 // pred_fallthru
      _
    // Predicated region
    $region22: #{tpu_custom_call.1} parent=1 // pred_check
      _
    $region23: #{tpu_custom_call.1} parent=1 // pred_check_branch
      %1744 = sbr.rel (0) target = $region25
    $region24: #{tpu_custom_call.1} parent=1 // pred_region
      %1745 = dma.done [#allocation4], 128
    $region25: #{tpu_custom_call.1} parent=1 // pred_fallthru
      _
    %1746 = vsyncpa [#allocation3], 1
    %1747 = vsyncpa [#allocation6], 1
    %1748 = vsyncpa [#allocation4], 1

</llo_original>
